<compile_context>
chip_gen: v5e
topology: v5e:2x2
jax: 0.10.0
libtpu: 0.0.40
codegen_flags: <defaults>
</compile_context>

<pallas_src>
import functools
from typing import Any, NamedTuple, Optional

import jax
import jax.numpy as jnp
from jax.experimental import pallas as pl
from jax.experimental.pallas import tpu as pltpu

NUM_BITS = 8
SCALE = 0.05                           # fixed per-tensor scale of the quantizer
INV_SCALE = 1.0 / SCALE                # multiply instead of divide on the VPU
QMIN = float(-(2 ** (NUM_BITS - 1)))   # -128.0
QMAX = float(2 ** (NUM_BITS - 1) - 1)  # 127.0


def _fake_quant(t):
    # Quantized values are small integers in [-128, 127]; exactly
    # representable in bf16 and int8, so MXU matmuls on them are exact.
    return jnp.clip(jnp.round(t * INV_SCALE), QMIN, QMAX)


def _round_up(x, m):
    return (x + m - 1) // m * m


class _Config(NamedTuple):
    gen: str
    operand_dtype: Any      # dtype fed to the MXU (int8 on v5e/v6e, bf16 otherwise)
    acc_dtype: Any          # MXU accumulator dtype (int32 / float32)
    m_gran: int             # M tile granularity (32 for int8 sublane packing)
    n_gran: int             # N padding granularity (256 on 256-wide MXUs)
    k_gran: int             # K padding granularity
    cap_m: int
    cap_n: int
    cap_k: int
    vmem_limit: Optional[int]
    weight_buffers: int     # pipeline depth for the weight stream


def _portable_config() -> _Config:
    # Safe everywhere: bf16 MXU operands, f32 accumulation, default VMEM limit.
    return _Config("generic", jnp.bfloat16, jnp.float32,
                   8, 128, 128, 512, 512, 2048, None, 2)


def _tpu_config() -> _Config:
    try:
        kind = jax.devices()[0].device_kind.lower()
    except Exception:
        kind = ""
    if "v5" in kind:
        # int MXU, lowest HBM BW -> int8 operands + deeper weight buffering.
        return _Config("v5", jnp.int8, jnp.int32,
                       32, 128, 128, 512, 512, 2048, 100 * 1024 * 1024, 3)
    if "v6" in kind:
        # int MXU (2x256^2) -> int8 operands, 256-aligned N/K tiles.
        return _Config("v6", jnp.int8, jnp.int32,
                       32, 256, 256, 512, 512, 2048, 100 * 1024 * 1024, 2)
    if "v7" in kind or "7x" in kind:
        # No int MXU; 64 MiB VMEM -> cap well below physical; 2 TensorCores.
        return _Config("v7", jnp.bfloat16, jnp.float32,
                       8, 256, 256, 512, 512, 2048, 48 * 1024 * 1024, 2)
    return _portable_config()


def _padded_param_dims(K, N, cfg: _Config):
    """Padded (Kp, Np) for the prepared weight/bias, minimizing pad waste."""
    kp_min = _round_up(K, cfg.k_gran)
    Kp = kp_min if kp_min <= cfg.cap_k else _round_up(K, cfg.cap_k)
    np_min = _round_up(N, cfg.n_gran)
    Np = np_min if np_min <= cfg.cap_n else _round_up(N, cfg.cap_n)
    return Kp, Np


def _tiles(B, Kp, Np, cfg: _Config):
    tm = min(cfg.cap_m, _round_up(B, cfg.m_gran))
    Mp = _round_up(B, tm)
    tk = min(cfg.cap_k, Kp)   # divides Kp by construction of _padded_param_dims
    tn = min(cfg.cap_n, Np)   # divides Np by construction
    # v7x has 2 TensorCores sharded over "parallel" grid axes: for tiny-M
    # problems make sure at least one parallel axis has extent > 1.
    if cfg.gen == "v7" and Mp // tm == 1 and Np // tn == 1 and tn % 256 == 0:
        tn //= 2              # still a multiple of 128 -> lane-dense output
    return tm, tn, tk, Mp


def _make_kernel(acc_dtype):
    def kernel(x_ref, w_ref, b_ref, o_ref):
        """One (tm, tn) output tile; K (in_features) is the reduction axis.

        The output block's index_map ignores k, so o_ref is resident across
        the K axis and doubles as the accumulator (no VMEM scratch needed).
        """
        k = pl.program_id(2)

        @pl.when(k == 0)
        def _init():
            o_ref[...] = jnp.zeros_like(o_ref)

        # Operands arrive pre-fake-quantized (int8 on v5e/v6e, bf16 on v7x);
        # weight is pre-transposed to (K, N): contraction directly along K,
        # lane-dense out_features on the RHS and output.
        o_ref[...] += jnp.dot(
            x_ref[...], w_ref[...], preferred_element_type=acc_dtype
        ).astype(o_ref.dtype)

        @pl.when(k == pl.num_programs(2) - 1)
        def _finalize():
            # Bias add + single dequantize, once per output tile.
            o_ref[...] = (o_ref[...] + b_ref[...]) * SCALE

    return kernel


def _weight_spec(tk, tn, buffers):
    idx = lambda i, j, k: (k, j)
    if buffers and buffers > 2:
        try:
            return pl.BlockSpec((tk, tn), idx, pipeline_mode=pl.Buffered(buffers))
        except Exception:
            pass  # fall back to the default double-buffered spec
    return pl.BlockSpec((tk, tn), idx)


def prepare_params(weight, bias, cfg: Optional[_Config] = None):
    """One-time weight/bias prep: fake-quantize, transpose to (K, N), pad.

    Hoisted out of the per-call path so the full f32 weight is not re-read /
    re-written on every forward call.
    """
    cfg = cfg or _tpu_config()
    N, K = weight.shape
    Kp, Np = _padded_param_dims(K, N, cfg)
    # Zero padding is quantization-neutral: quantize(0) == 0.
    w_q = _fake_quant(weight).astype(cfg.operand_dtype).T          # (K, N)
    w_q = jnp.pad(w_q, ((0, Kp - K), (0, Np - N)))                  # (Kp, Np)
    if bias is None:
        b_q = jnp.zeros((1, Np), jnp.float32)
    else:
        b_q = _fake_quant(bias).astype(jnp.float32).reshape(1, N)
        b_q = jnp.pad(b_q, ((0, 0), (0, Np - N)))                   # (1, Np)
    return w_q, b_q


def quantized_linear_forward(x, w_q, b_q, out_features, cfg: Optional[_Config] = None):
    """x: (B, K) f32; w_q: (Kp, Np) prepared weight; b_q: (1, Np) f32."""
    cfg = cfg or _tpu_config()
    B, K = x.shape
    Kp, Np = w_q.shape
    tm, tn, tk, Mp = _tiles(B, Kp, Np, cfg)

    # Fake-quantize + cast + pad the activations ONCE (fused by XLA with the
    # pad), instead of re-quantizing the same (i,k) tile per N block in-kernel.
    x_q = _fake_quant(x).astype(cfg.operand_dtype)
    x_q = jnp.pad(x_q, ((0, Mp - B), (0, Kp - K)))

    grid = (Mp // tm, Np // tn, Kp // tk)

    cp_kwargs = dict(dimension_semantics=("parallel", "parallel", "arbitrary"))
    if cfg.vmem_limit is not None:
        cp_kwargs["vmem_limit_bytes"] = cfg.vmem_limit

    out = pl.pallas_call(
        _make_kernel(cfg.acc_dtype),
        out_shape=jax.ShapeDtypeStruct((Mp, Np), jnp.float32),
        grid_spec=pltpu.PrefetchScalarGridSpec(
            num_scalar_prefetch=0,
            grid=grid,
            in_specs=[
                pl.BlockSpec((tm, tk), lambda i, j, k: (i, k)),   # x (prequant)
                _weight_spec(tk, tn, cfg.weight_buffers),         # W^T (prequant)
                pl.BlockSpec((1, tn), lambda i, j, k: (0, j)),    # bias (prequant)
            ],
            out_specs=pl.BlockSpec((tm, tn), lambda i, j, k: (i, j)),
        ),
        compiler_params=pltpu.CompilerParams(**cp_kwargs),
    )(x_q, w_q, b_q)

    return out[:B, :out_features]


def quantized_linear(x, weight, bias):
    """Convenience one-shot wrapper (prep + forward)."""
    cfg = _tpu_config()
    w_q, b_q = prepare_params(weight, bias, cfg)
    return quantized_linear_forward(x, w_q, b_q, weight.shape[0], cfg)


def quantized_linear_ref(x, weight, bias):
    x_q = _fake_quant(x)
    w_q = _fake_quant(weight)
    b_q = _fake_quant(bias)
    return (x_q @ w_q.T + b_q) * SCALE


if __name__ == "__main__":
    key = jax.random.PRNGKey(0)
    k_x, k_w, k_b = jax.random.split(key, 3)

    batch = 8
    in_features = 768      # multiple of 128/256 -> zero K padding (tk = 768)
    out_features = 192     # padded once (at prep time) to 256 lanes

    x = jax.random.normal(k_x, (batch, in_features), dtype=jnp.float32)
    # Deterministic "nn.Linear" parameter init (uniform, Kaiming-like bound).
    bound = 1.0 / (in_features ** 0.5)
    weight = jax.random.uniform(
        k_w, (out_features, in_features), minval=-bound, maxval=bound,
        dtype=jnp.float32)
    bias = jax.random.uniform(
        k_b, (out_features,), minval=-bound, maxval=bound, dtype=jnp.float32)

    def _run(cfg):
        w_q, b_q = prepare_params(weight, bias, cfg)      # one-time prep, cached
        fwd = jax.jit(functools.partial(
            quantized_linear_forward, out_features=out_features, cfg=cfg))
        return jax.block_until_ready(fwd(x, w_q, b_q))

    try:
        out = _run(_tpu_config())
    except Exception:
        # If the generation-specific fast path (e.g. int8 MXU) fails to lower
        # on this chip, fall back to the portable bf16 path.
        out = _run(_portable_config())

    ref = quantized_linear_ref(x, weight, bias)
    assert out.shape == (batch, out_features)
    assert jnp.allclose(out, ref, atol=1e-4, rtol=1e-5), "mismatch vs reference"

    print("KERNEL_OK")
</pallas_src>

<mosaic_0001>
module attributes {stable_mosaic.version = 11 : i64} {
  func.func @kernel(%arg0: i32, %arg1: i32, %arg2: i32, %arg3: memref<8x768xbf16, #tpu.memory_space<vmem>>, %arg4: memref<768x256xbf16, #tpu.memory_space<vmem>>, %arg5: memref<1x256xf32, #tpu.memory_space<vmem>>, %arg6: memref<8x256xf32, #tpu.memory_space<vmem>>) attributes {dimension_semantics = [#tpu.dimension_semantics<parallel>, #tpu.dimension_semantics<parallel>, #tpu.dimension_semantics<arbitrary>], iteration_bounds = array<i64: 1, 1, 1>, scalar_prefetch = 0 : i64, scratch_operands = 0 : i64, tpu.core_type = #tpu.core_type<tc>, window_params = [{transform_indices = @transform_0, window_bounds = array<i64: 8, 768>}, {transform_indices = @transform_1, window_bounds = array<i64: 768, 256>}, {transform_indices = @transform_2, window_bounds = array<i64: 1, 256>}, {transform_indices = @transform_3, window_bounds = array<i64: 8, 256>}]} {
    %c0_i32 = arith.constant 0 : i32
    %0 = arith.cmpi eq, %arg2, %c0_i32 : i32
    %1 = arith.extui %0 : i1 to i32
    %c0_i32_0 = arith.constant 0 : i32
    %2 = arith.cmpi ne, %1, %c0_i32_0 : i32
    scf.if %2 {
      %cst_10 = arith.constant 0.000000e+00 : f32
      %12 = vector.broadcast %cst_10 : f32 to vector<8x256xf32>
      %c0_11 = arith.constant 0 : index
      %c0_12 = arith.constant 0 : index
      %13 = vector.load %arg6[%c0_11, %c0_12] : memref<8x256xf32, #tpu.memory_space<vmem>>, vector<8x256xf32>
      tpu.vector_store %arg6[%c0_11, %c0_12], %12 {strides = array<i32>} : memref<8x256xf32, #tpu.memory_space<vmem>>, vector<8x256xf32>,
    } else {
    }
    %c0 = arith.constant 0 : index
    %c0_1 = arith.constant 0 : index
    %3 = vector.load %arg6[%c0, %c0_1] : memref<8x256xf32, #tpu.memory_space<vmem>>, vector<8x256xf32>
    %c0_2 = arith.constant 0 : index
    %c0_3 = arith.constant 0 : index
    %4 = vector.load %arg3[%c0_2, %c0_3] : memref<8x768xbf16, #tpu.memory_space<vmem>>, vector<8x768xbf16>
    %c0_4 = arith.constant 0 : index
    %c0_5 = arith.constant 0 : index
    %5 = vector.load %arg4[%c0_4, %c0_5] : memref<768x256xbf16, #tpu.memory_space<vmem>>, vector<768x256xbf16>
    %cst = arith.constant dense<0.000000e+00> : vector<8x256xf32>
    %6 = tpu.matmul %4, %5, %cst {dimension_numbers = #tpu.dot_dimension_numbers<[1], [0], [0], [1], [0, 0, 1, 1], [], []>} : vector<8x768xbf16>, vector<768x256xbf16>, vector<8x256xf32> -> vector<8x256xf32>
    %7 = arith.addf %3, %6 : vector<8x256xf32>
    %c0_6 = arith.constant 0 : index
    %c0_7 = arith.constant 0 : index
    %8 = vector.load %arg6[%c0_6, %c0_7] : memref<8x256xf32, #tpu.memory_space<vmem>>, vector<8x256xf32>
    tpu.vector_store %arg6[%c0_6, %c0_7], %7 {strides = array<i32>} : memref<8x256xf32, #tpu.memory_space<vmem>>, vector<8x256xf32>,
    %c0_i32_8 = arith.constant 0 : i32
    %9 = arith.cmpi eq, %arg2, %c0_i32_8 : i32
    %10 = arith.extui %9 : i1 to i32
    %c0_i32_9 = arith.constant 0 : i32
    %11 = arith.cmpi ne, %10, %c0_i32_9 : i32
    scf.if %11 {
      %c0_10 = arith.constant 0 : index
      %c0_11 = arith.constant 0 : index
      %12 = vector.load %arg6[%c0_10, %c0_11] : memref<8x256xf32, #tpu.memory_space<vmem>>, vector<8x256xf32>
      %c0_12 = arith.constant 0 : index
      %c0_13 = arith.constant 0 : index
      %13 = vector.load %arg5[%c0_12, %c0_13] : memref<1x256xf32, #tpu.memory_space<vmem>>, vector<1x256xf32>
      %14 = vector.broadcast %13 : vector<1x256xf32> to vector<8x256xf32>
      %15 = arith.addf %12, %14 : vector<8x256xf32>
      %cst_14 = arith.constant 5.000000e-02 : f32
      %16 = vector.broadcast %cst_14 : f32 to vector<8x256xf32>
      %17 = arith.mulf %15, %16 : vector<8x256xf32>
      %c0_15 = arith.constant 0 : index
      %c0_16 = arith.constant 0 : index
      %18 = vector.load %arg6[%c0_15, %c0_16] : memref<8x256xf32, #tpu.memory_space<vmem>>, vector<8x256xf32>
      tpu.vector_store %arg6[%c0_15, %c0_16], %17 {strides = array<i32>} : memref<8x256xf32, #tpu.memory_space<vmem>>, vector<8x256xf32>,
    } else {
    }
    return
  }
  func.func @transform_0(%arg0: i32, %arg1: i32, %arg2: i32) -> (i32, i32) {
    %c0_i32 = arith.constant 0 : i32
    return %arg0, %arg2 : i32, i32
  }
  func.func @transform_1(%arg0: i32, %arg1: i32, %arg2: i32) -> (i32, i32) {
    %c0_i32 = arith.constant 0 : i32
    return %arg2, %arg1 : i32, i32
  }
  func.func @transform_2(%arg0: i32, %arg1: i32, %arg2: i32) -> (i32, i32) {
    %c0_i32 = arith.constant 0 : i32
    %c0_i32_0 = arith.constant 0 : i32
    return %c0_i32, %arg1 : i32, i32
  }
  func.func @transform_3(%arg0: i32, %arg1: i32, %arg2: i32) -> (i32, i32) {
    %c0_i32 = arith.constant 0 : i32
    return %arg0, %arg1 : i32, i32
  }
}

module attributes {stable_mosaic.version = 11 : i64} {
  func.func @kernel(%arg0: i32, %arg1: i32, %arg2: i32, %arg3: memref<8x768xbf16, #tpu.memory_space<vmem>>, %arg4: memref<768x256xbf16, #tpu.memory_space<vmem>>, %arg5: memref<1x256xf32, #tpu.memory_space<vmem>>, %arg6: memref<8x256xf32, #tpu.memory_space<vmem>>) attributes {dimension_semantics = [#tpu.dimension_semantics<parallel>, #tpu.dimension_semantics<parallel>, #tpu.dimension_semantics<arbitrary>], iteration_bounds = array<i64: 1, 1, 1>, scalar_prefetch = 0 : i64, scratch_operands = 0 : i64, tpu.core_type = #tpu.core_type<tc>, window_params = [{transform_indices = @transform_0, window_bounds = array<i64: 8, 768>}, {transform_indices = @transform_1, window_bounds = array<i64: 768, 256>}, {transform_indices = @transform_2, window_bounds = array<i64: 1, 256>}, {transform_indices = @transform_3, window_bounds = array<i64: 8, 256>}]} {
    %c0_i32 = arith.constant 0 : i32
    %0 = arith.cmpi eq, %arg2, %c0_i32 : i32
    %1 = arith.extui %0 : i1 to i32
    %c0_i32_0 = arith.constant 0 : i32
    %2 = arith.cmpi ne, %1, %c0_i32_0 : i32
    scf.if %2 {
      %cst_10 = arith.constant 0.000000e+00 : f32
      %12 = vector.broadcast %cst_10 : f32 to vector<8x256xf32>
      %c0_11 = arith.constant 0 : index
      %c0_12 = arith.constant 0 : index
      %13 = vector.load %arg6[%c0_11, %c0_12] : memref<8x256xf32, #tpu.memory_space<vmem>>, vector<8x256xf32>
      tpu.vector_store %arg6[%c0_11, %c0_12], %12 {strides = array<i32>} : memref<8x256xf32, #tpu.memory_space<vmem>>, vector<8x256xf32>,
    } else {
    }
    %c0 = arith.constant 0 : index
    %c0_1 = arith.constant 0 : index
    %3 = vector.load %arg6[%c0, %c0_1] : memref<8x256xf32, #tpu.memory_space<vmem>>, vector<8x256xf32>
    %c0_2 = arith.constant 0 : index
    %c0_3 = arith.constant 0 : index
    %4 = vector.load %arg3[%c0_2, %c0_3] : memref<8x768xbf16, #tpu.memory_space<vmem>>, vector<8x768xbf16>
    %c0_4 = arith.constant 0 : index
    %c0_5 = arith.constant 0 : index
    %5 = vector.load %arg4[%c0_4, %c0_5] : memref<768x256xbf16, #tpu.memory_space<vmem>>, vector<768x256xbf16>
    %cst = arith.constant dense<0.000000e+00> : vector<8x256xf32>
    %6 = tpu.matmul %4, %5, %cst {dimension_numbers = #tpu.dot_dimension_numbers<[1], [0], [0], [1], [0, 0, 1, 1], [], []>} : vector<8x768xbf16>, vector<768x256xbf16>, vector<8x256xf32> -> vector<8x256xf32>
    %7 = arith.addf %3, %6 : vector<8x256xf32>
    %c0_6 = arith.constant 0 : index
    %c0_7 = arith.constant 0 : index
    %8 = vector.load %arg6[%c0_6, %c0_7] : memref<8x256xf32, #tpu.memory_space<vmem>>, vector<8x256xf32>
    tpu.vector_store %arg6[%c0_6, %c0_7], %7 {strides = array<i32>} : memref<8x256xf32, #tpu.memory_space<vmem>>, vector<8x256xf32>,
    %c0_i32_8 = arith.constant 0 : i32
    %9 = arith.cmpi eq, %arg2, %c0_i32_8 : i32
    %10 = arith.extui %9 : i1 to i32
    %c0_i32_9 = arith.constant 0 : i32
    %11 = arith.cmpi ne, %10, %c0_i32_9 : i32
    scf.if %11 {
      %c0_10 = arith.constant 0 : index
      %c0_11 = arith.constant 0 : index
      %12 = vector.load %arg6[%c0_10, %c0_11] : memref<8x256xf32, #tpu.memory_space<vmem>>, vector<8x256xf32>
      %c0_12 = arith.constant 0 : index
      %c0_13 = arith.constant 0 : index
      %13 = vector.load %arg5[%c0_12, %c0_13] : memref<1x256xf32, #tpu.memory_space<vmem>>, vector<1x256xf32>
      %14 = vector.broadcast %13 : vector<1x256xf32> to vector<8x256xf32>
      %15 = arith.addf %12, %14 : vector<8x256xf32>
      %cst_14 = arith.constant 5.000000e-02 : f32
      %16 = vector.broadcast %cst_14 : f32 to vector<8x256xf32>
      %17 = arith.mulf %15, %16 : vector<8x256xf32>
      %c0_15 = arith.constant 0 : index
      %c0_16 = arith.constant 0 : index
      %18 = vector.load %arg6[%c0_15, %c0_16] : memref<8x256xf32, #tpu.memory_space<vmem>>, vector<8x256xf32>
      tpu.vector_store %arg6[%c0_15, %c0_16], %17 {strides = array<i32>} : memref<8x256xf32, #tpu.memory_space<vmem>>, vector<8x256xf32>,
    } else {
    }
    return
  }
  func.func @transform_0(%arg0: i32, %arg1: i32, %arg2: i32) -> (i32, i32) {
    %c0_i32 = arith.constant 0 : i32
    return %arg0, %arg2 : i32, i32
  }
  func.func @transform_1(%arg0: i32, %arg1: i32, %arg2: i32) -> (i32, i32) {
    %c0_i32 = arith.constant 0 : i32
    return %arg2, %arg1 : i32, i32
  }
  func.func @transform_2(%arg0: i32, %arg1: i32, %arg2: i32) -> (i32, i32) {
    %c0_i32 = arith.constant 0 : i32
    %c0_i32_0 = arith.constant 0 : i32
    return %c0_i32, %arg1 : i32, i32
  }
  func.func @transform_3(%arg0: i32, %arg1: i32, %arg2: i32) -> (i32, i32) {
    %c0_i32 = arith.constant 0 : i32
    return %arg0, %arg1 : i32, i32
  }
}

</mosaic_0001>

<llo_original>
// kernel: quantized_linear_forward.1
$region0: #{quantized_linear_forward.1}
  #allocation0 [shape = 'u32[]', space=smem, size = 0x4, offset = 0x4, fixed_abs, tag = 'smem constant byte address 0x4 - core index']
  #allocation1 [shape = 'u32[72,128]{1,0:T(1,128)}', space=vmem, size = 0x9000, scoped, tag = 'internal scratch']
  %s0 = inlined_call_operand.vmem [shape: bf16[8,768], index: 0, kind: input, shape index: {}]
  %s1 = inlined_call_operand.hbm [shape: bf16[768,256], index: 1, kind: input, shape index: {}]
  %s2 = inlined_call_operand.vmem [shape: f32[1,256], index: 2, kind: input, shape index: {}]
  %s3 = inlined_call_operand.hbm [shape: f32[8,256], index: 3, kind: output, shape index: {}]
  %s4 = sld [smem:[#allocation0]]
  $region34: #{quantized_linear_forward.1} parent=0
    _
  %s6 = ssub.s32 1, %s4
  %s7 = scalar_select 0, %s6, %s4
  $region1: #{quantized_linear_forward.1} parent=0
    #allocation2 [shape = 'u8[393216]{0}', space=vmem, size = 0x60000, scoped, tag = 'input window, operand 1, single buffered']
    #allocation3 [shape = 's32[1]{0}', space=sflag, size = 0x4, scoped, tag = 'scoped memory for quantized_linear_forward.1']
    #allocation4 [shape = 's32[1]{0}', space=sflag, size = 0x4, scoped, tag = 'scoped memory for quantized_linear_forward.1']
    #allocation5 [shape = 'u8[8192]{0}', space=vmem, size = 0x2000, scoped, tag = 'output window, operand 0, single buffered']
    %8 = vsyncpa [#allocation3], 0
    %9 = vsyncpa [#allocation4], 0
    // Predicated region
    $region2: #{quantized_linear_forward.1} parent=1 // pred_check
      _
    $region3: #{quantized_linear_forward.1} parent=1 // pred_check_branch
      %11 = sbr.rel (0) target = $region5
    $region4: #{quantized_linear_forward.1} parent=1 // pred_region
      _
    $region5: #{quantized_linear_forward.1} parent=1 // pred_fallthru
      _
    // Predicated region
    $region6: #{quantized_linear_forward.1} parent=1 // pred_check
      _
    $region7: #{quantized_linear_forward.1} parent=1 // pred_check_branch
      %13 = sbr.rel (0) target = $region9
    $region8: #{quantized_linear_forward.1} parent=1 // pred_region
      %15 = vsyncadd [#allocation3], 0
      %s16 = sshll.u32 %s1, 4
      %s17 = int_to_ptr.hbm [resolvable:$true] %s16
      %s18 = sshll.u32 [#allocation2], 4
      %s19 = int_to_ptr.vmem [resolvable:$true] %s18
      %24 = dma.hbm_to_vmem [thread:$0]  %s17, 12288, %s19, [#allocation3], 128, 128, 8
    $region9: #{quantized_linear_forward.1} parent=1 // pred_fallthru
      _
    // Predicated region
    $region10: #{quantized_linear_forward.1} parent=1 // pred_check
      _
    $region11: #{quantized_linear_forward.1} parent=1 // pred_check_branch
      %26 = sbr.rel (0) target = $region13
    $region12: #{quantized_linear_forward.1} parent=1 // pred_region
      _
    $region13: #{quantized_linear_forward.1} parent=1 // pred_fallthru
      _
    // Predicated region
    $region14: #{quantized_linear_forward.1} parent=1 // pred_check
      _
    $region15: #{quantized_linear_forward.1} parent=1 // pred_check_branch
      %28 = sbr.rel (0) target = $region17
    $region16: #{quantized_linear_forward.1} parent=1 // pred_region
      %30 = dma.done [#allocation3], 12288
    $region17: #{quantized_linear_forward.1} parent=1 // pred_fallthru
      _
    %p31 = scmp.eq.s32.totalorder 0, 0
    // Predicated region
    $region18: #{quantized_linear_forward.1} parent=1 // pred_check
      %p32 = pneg %p31
    $region19: #{quantized_linear_forward.1} parent=1 // pred_check_branch
      %34 = sbr.rel (%p32) target = $region21
    $region20: #{quantized_linear_forward.1} parent=1 // pred_region
      %35 = vst [vmem:[#allocation5] sm:$0xff] 0.0
      %36 = vst [vmem:[#allocation5 + $0x8] sm:$0xff] 0.0
    $region21: #{quantized_linear_forward.1} parent=1 // pred_fallthru
      _
    %v37 = vld [vmem:[#allocation5] sm:$0xff]
    %v38 = vld [vmem:[#allocation5 + $0x8] sm:$0xff]
    %v39 = vld [vmem:[%s0] sm:$0xff]
    %v40 = vld [vmem:[%s0 + $0x8] sm:$0xff]
    %v41 = vld [vmem:[%s0 + $0x10] sm:$0xff]
    %v42 = vld [vmem:[#allocation2] sm:$0xff]
    %v43 = vld [vmem:[#allocation2 + $0x8] sm:$0xff]
    %v44 = vld [vmem:[#allocation2 + $0x10] sm:$0xff]
    %v45 = vld [vmem:[#allocation2 + $0x18] sm:$0xff]
    %v46 = vld [vmem:[#allocation2 + $0x20] sm:$0xff]
    %v47 = vld [vmem:[#allocation2 + $0x28] sm:$0xff]
    %v48 = vld [vmem:[#allocation2 + $0x30] sm:$0xff]
    %v49 = vld [vmem:[#allocation2 + $0x38] sm:$0xff]
    %v50 = vld [vmem:[#allocation2 + $0x40] sm:$0xff]
    %v51 = vld [vmem:[#allocation2 + $0x48] sm:$0xff]
    %v52 = vld [vmem:[#allocation2 + $0x50] sm:$0xff]
    %v53 = vld [vmem:[#allocation2 + $0x58] sm:$0xff]
    %v54 = vld [vmem:[#allocation2 + $0x60] sm:$0xff]
    %v55 = vld [vmem:[#allocation2 + $0x68] sm:$0xff]
    %v56 = vld [vmem:[#allocation2 + $0x70] sm:$0xff]
    %v57 = vld [vmem:[#allocation2 + $0x78] sm:$0xff]
    %v58 = vld [vmem:[#allocation2 + $0x80] sm:$0xff]
    %v59 = vld [vmem:[#allocation2 + $0x88] sm:$0xff]
    %v60 = vld [vmem:[#allocation2 + $0x90] sm:$0xff]
    %v61 = vld [vmem:[#allocation2 + $0x98] sm:$0xff]
    %v62 = vld [vmem:[#allocation2 + $0xa0] sm:$0xff]
    %v63 = vld [vmem:[#allocation2 + $0xa8] sm:$0xff]
    %v64 = vld [vmem:[#allocation2 + $0xb0] sm:$0xff]
    %v65 = vld [vmem:[#allocation2 + $0xb8] sm:$0xff]
    %v66 = vld [vmem:[#allocation2 + $0xc0] sm:$0xff]
    %v67 = vld [vmem:[#allocation2 + $0xc8] sm:$0xff]
    %v68 = vld [vmem:[#allocation2 + $0xd0] sm:$0xff]
    %v69 = vld [vmem:[#allocation2 + $0xd8] sm:$0xff]
    %v70 = vld [vmem:[#allocation2 + $0xe0] sm:$0xff]
    %v71 = vld [vmem:[#allocation2 + $0xe8] sm:$0xff]
    %v72 = vld [vmem:[#allocation2 + $0xf0] sm:$0xff]
    %v73 = vld [vmem:[#allocation2 + $0xf8] sm:$0xff]
    %v74 = vld [vmem:[#allocation2 + $0x100] sm:$0xff]
    %v75 = vld [vmem:[#allocation2 + $0x108] sm:$0xff]
    %v76 = vld [vmem:[#allocation2 + $0x110] sm:$0xff]
    %v77 = vld [vmem:[#allocation2 + $0x118] sm:$0xff]
    %v78 = vld [vmem:[#allocation2 + $0x120] sm:$0xff]
    %v79 = vld [vmem:[#allocation2 + $0x128] sm:$0xff]
    %v80 = vld [vmem:[#allocation2 + $0x130] sm:$0xff]
    %v81 = vld [vmem:[#allocation2 + $0x138] sm:$0xff]
    %v82 = vld [vmem:[#allocation2 + $0x140] sm:$0xff]
    %v83 = vld [vmem:[#allocation2 + $0x148] sm:$0xff]
    %v84 = vld [vmem:[#allocation2 + $0x150] sm:$0xff]
    %v85 = vld [vmem:[#allocation2 + $0x158] sm:$0xff]
    %v86 = vld [vmem:[#allocation2 + $0x160] sm:$0xff]
    %v87 = vld [vmem:[#allocation2 + $0x168] sm:$0xff]
    %v88 = vld [vmem:[#allocation2 + $0x170] sm:$0xff]
    %v89 = vld [vmem:[#allocation2 + $0x178] sm:$0xff]
    %v90 = vld [vmem:[#allocation2 + $0x180] sm:$0xff]
    %v91 = vld [vmem:[#allocation2 + $0x188] sm:$0xff]
    %v92 = vld [vmem:[#allocation2 + $0x190] sm:$0xff]
    %v93 = vld [vmem:[#allocation2 + $0x198] sm:$0xff]
    %v94 = vld [vmem:[#allocation2 + $0x1a0] sm:$0xff]
    %v95 = vld [vmem:[#allocation2 + $0x1a8] sm:$0xff]
    %v96 = vld [vmem:[#allocation2 + $0x1b0] sm:$0xff]
    %v97 = vld [vmem:[#allocation2 + $0x1b8] sm:$0xff]
    %v98 = vld [vmem:[#allocation2 + $0x1c0] sm:$0xff]
    %v99 = vld [vmem:[#allocation2 + $0x1c8] sm:$0xff]
    %v100 = vld [vmem:[#allocation2 + $0x1d0] sm:$0xff]
    %v101 = vld [vmem:[#allocation2 + $0x1d8] sm:$0xff]
    %v102 = vld [vmem:[#allocation2 + $0x1e0] sm:$0xff]
    %v103 = vld [vmem:[#allocation2 + $0x1e8] sm:$0xff]
    %v104 = vld [vmem:[#allocation2 + $0x1f0] sm:$0xff]
    %v105 = vld [vmem:[#allocation2 + $0x1f8] sm:$0xff]
    %v106 = vld [vmem:[#allocation2 + $0x200] sm:$0xff]
    %v107 = vld [vmem:[#allocation2 + $0x208] sm:$0xff]
    %v108 = vld [vmem:[#allocation2 + $0x210] sm:$0xff]
    %v109 = vld [vmem:[#allocation2 + $0x218] sm:$0xff]
    %v110 = vld [vmem:[#allocation2 + $0x220] sm:$0xff]
    %v111 = vld [vmem:[#allocation2 + $0x228] sm:$0xff]
    %v112 = vld [vmem:[#allocation2 + $0x230] sm:$0xff]
    %v113 = vld [vmem:[#allocation2 + $0x238] sm:$0xff]
    %v114 = vld [vmem:[#allocation2 + $0x240] sm:$0xff]
    %v115 = vld [vmem:[#allocation2 + $0x248] sm:$0xff]
    %v116 = vld [vmem:[#allocation2 + $0x250] sm:$0xff]
    %v117 = vld [vmem:[#allocation2 + $0x258] sm:$0xff]
    %v118 = vld [vmem:[#allocation2 + $0x260] sm:$0xff]
    %v119 = vld [vmem:[#allocation2 + $0x268] sm:$0xff]
    %v120 = vld [vmem:[#allocation2 + $0x270] sm:$0xff]
    %v121 = vld [vmem:[#allocation2 + $0x278] sm:$0xff]
    %v122 = vld [vmem:[#allocation2 + $0x280] sm:$0xff]
    %v123 = vld [vmem:[#allocation2 + $0x288] sm:$0xff]
    %v124 = vld [vmem:[#allocation2 + $0x290] sm:$0xff]
    %v125 = vld [vmem:[#allocation2 + $0x298] sm:$0xff]
    %v126 = vld [vmem:[#allocation2 + $0x2a0] sm:$0xff]
    %v127 = vld [vmem:[#allocation2 + $0x2a8] sm:$0xff]
    %v128 = vld [vmem:[#allocation2 + $0x2b0] sm:$0xff]
    %v129 = vld [vmem:[#allocation2 + $0x2b8] sm:$0xff]
    %v130 = vld [vmem:[#allocation2 + $0x2c0] sm:$0xff]
    %v131 = vld [vmem:[#allocation2 + $0x2c8] sm:$0xff]
    %v132 = vld [vmem:[#allocation2 + $0x2d0] sm:$0xff]
    %v133 = vld [vmem:[#allocation2 + $0x2d8] sm:$0xff]
    %v134 = vld [vmem:[#allocation2 + $0x2e0] sm:$0xff]
    %v135 = vld [vmem:[#allocation2 + $0x2e8] sm:$0xff]
    %v136 = vld [vmem:[#allocation2 + $0x2f0] sm:$0xff]
    %v137 = vld [vmem:[#allocation2 + $0x2f8] sm:$0xff]
    %v141 = vunpack.c.l.b16 %v39
    %v142 = vunpack.c.h.b16 %v39
    %v143 = vunpack.c.l.b16 %v40
    %v144 = vunpack.c.h.b16 %v40
    %v145 = vunpack.c.l.b16 %v41
    %v146 = vunpack.c.h.b16 %v41
    %v147 = vpack.c.b16 %v141, %v141
    %v148 = vpack.c.b16 %v142, %v142
    %v149 = vpack.c.b16 %v143, %v143
    %v150 = vpack.c.b16 %v144, %v144
    %v151 = vpack.c.b16 %v145, %v145
    %v152 = vpack.c.b16 %v146, %v146
    %v255 = vunpack.c.l.b16 %v42
    %v256 = vunpack.c.h.b16 %v42
    %v257 = vunpack.c.l.b16 %v43
    %v258 = vunpack.c.h.b16 %v43
    %v259 = vunpack.c.l.b16 %v44
    %v260 = vunpack.c.h.b16 %v44
    %v261 = vunpack.c.l.b16 %v45
    %v262 = vunpack.c.h.b16 %v45
    %v263 = vunpack.c.l.b16 %v46
    %v264 = vunpack.c.h.b16 %v46
    %v265 = vunpack.c.l.b16 %v47
    %v266 = vunpack.c.h.b16 %v47
    %v267 = vunpack.c.l.b16 %v48
    %v268 = vunpack.c.h.b16 %v48
    %v269 = vunpack.c.l.b16 %v49
    %v270 = vunpack.c.h.b16 %v49
    %v271 = vunpack.c.l.b16 %v50
    %v272 = vunpack.c.h.b16 %v50
    %v273 = vunpack.c.l.b16 %v51
    %v274 = vunpack.c.h.b16 %v51
    %v275 = vunpack.c.l.b16 %v52
    %v276 = vunpack.c.h.b16 %v52
    %v277 = vunpack.c.l.b16 %v53
    %v278 = vunpack.c.h.b16 %v53
    %v279 = vunpack.c.l.b16 %v54
    %v280 = vunpack.c.h.b16 %v54
    %v281 = vunpack.c.l.b16 %v55
    %v282 = vunpack.c.h.b16 %v55
    %v283 = vunpack.c.l.b16 %v56
    %v284 = vunpack.c.h.b16 %v56
    %v285 = vunpack.c.l.b16 %v57
    %v286 = vunpack.c.h.b16 %v57
    %v287 = vunpack.c.l.b16 %v58
    %v288 = vunpack.c.h.b16 %v58
    %v289 = vunpack.c.l.b16 %v59
    %v290 = vunpack.c.h.b16 %v59
    %v291 = vunpack.c.l.b16 %v60
    %v292 = vunpack.c.h.b16 %v60
    %v293 = vunpack.c.l.b16 %v61
    %v294 = vunpack.c.h.b16 %v61
    %v295 = vunpack.c.l.b16 %v62
    %v296 = vunpack.c.h.b16 %v62
    %v297 = vunpack.c.l.b16 %v63
    %v298 = vunpack.c.h.b16 %v63
    %v299 = vunpack.c.l.b16 %v64
    %v300 = vunpack.c.h.b16 %v64
    %v301 = vunpack.c.l.b16 %v65
    %v302 = vunpack.c.h.b16 %v65
    %v303 = vunpack.c.l.b16 %v66
    %v304 = vunpack.c.h.b16 %v66
    %v305 = vunpack.c.l.b16 %v67
    %v306 = vunpack.c.h.b16 %v67
    %v307 = vunpack.c.l.b16 %v68
    %v308 = vunpack.c.h.b16 %v68
    %v309 = vunpack.c.l.b16 %v69
    %v310 = vunpack.c.h.b16 %v69
    %v311 = vunpack.c.l.b16 %v70
    %v312 = vunpack.c.h.b16 %v70
    %v313 = vunpack.c.l.b16 %v71
    %v314 = vunpack.c.h.b16 %v71
    %v315 = vunpack.c.l.b16 %v72
    %v316 = vunpack.c.h.b16 %v72
    %v317 = vunpack.c.l.b16 %v73
    %v318 = vunpack.c.h.b16 %v73
    %v319 = vunpack.c.l.b16 %v74
    %v320 = vunpack.c.h.b16 %v74
    %v321 = vunpack.c.l.b16 %v75
    %v322 = vunpack.c.h.b16 %v75
    %v323 = vunpack.c.l.b16 %v76
    %v324 = vunpack.c.h.b16 %v76
    %v325 = vunpack.c.l.b16 %v77
    %v326 = vunpack.c.h.b16 %v77
    %v327 = vunpack.c.l.b16 %v78
    %v328 = vunpack.c.h.b16 %v78
    %v329 = vunpack.c.l.b16 %v79
    %v330 = vunpack.c.h.b16 %v79
    %v331 = vunpack.c.l.b16 %v80
    %v332 = vunpack.c.h.b16 %v80
    %v333 = vunpack.c.l.b16 %v81
    %v334 = vunpack.c.h.b16 %v81
    %v335 = vunpack.c.l.b16 %v82
    %v336 = vunpack.c.h.b16 %v82
    %v337 = vunpack.c.l.b16 %v83
    %v338 = vunpack.c.h.b16 %v83
    %v339 = vunpack.c.l.b16 %v84
    %v340 = vunpack.c.h.b16 %v84
    %v341 = vunpack.c.l.b16 %v85
    %v342 = vunpack.c.h.b16 %v85
    %v343 = vunpack.c.l.b16 %v86
    %v344 = vunpack.c.h.b16 %v86
    %v345 = vunpack.c.l.b16 %v87
    %v346 = vunpack.c.h.b16 %v87
    %v347 = vunpack.c.l.b16 %v88
    %v348 = vunpack.c.h.b16 %v88
    %v349 = vunpack.c.l.b16 %v89
    %v350 = vunpack.c.h.b16 %v89
    %v351 = vunpack.c.l.b16 %v90
    %v352 = vunpack.c.h.b16 %v90
    %v353 = vunpack.c.l.b16 %v91
    %v354 = vunpack.c.h.b16 %v91
    %v355 = vunpack.c.l.b16 %v92
    %v356 = vunpack.c.h.b16 %v92
    %v357 = vunpack.c.l.b16 %v93
    %v358 = vunpack.c.h.b16 %v93
    %v359 = vunpack.c.l.b16 %v94
    %v360 = vunpack.c.h.b16 %v94
    %v361 = vunpack.c.l.b16 %v95
    %v362 = vunpack.c.h.b16 %v95
    %v363 = vunpack.c.l.b16 %v96
    %v364 = vunpack.c.h.b16 %v96
    %v365 = vunpack.c.l.b16 %v97
    %v366 = vunpack.c.h.b16 %v97
    %v367 = vunpack.c.l.b16 %v98
    %v368 = vunpack.c.h.b16 %v98
    %v369 = vunpack.c.l.b16 %v99
    %v370 = vunpack.c.h.b16 %v99
    %v371 = vunpack.c.l.b16 %v100
    %v372 = vunpack.c.h.b16 %v100
    %v373 = vunpack.c.l.b16 %v101
    %v374 = vunpack.c.h.b16 %v101
    %v375 = vunpack.c.l.b16 %v102
    %v376 = vunpack.c.h.b16 %v102
    %v377 = vunpack.c.l.b16 %v103
    %v378 = vunpack.c.h.b16 %v103
    %v379 = vunpack.c.l.b16 %v104
    %v380 = vunpack.c.h.b16 %v104
    %v381 = vunpack.c.l.b16 %v105
    %v382 = vunpack.c.h.b16 %v105
    %v383 = vunpack.c.l.b16 %v106
    %v384 = vunpack.c.h.b16 %v106
    %v385 = vunpack.c.l.b16 %v107
    %v386 = vunpack.c.h.b16 %v107
    %v387 = vunpack.c.l.b16 %v108
    %v388 = vunpack.c.h.b16 %v108
    %v389 = vunpack.c.l.b16 %v109
    %v390 = vunpack.c.h.b16 %v109
    %v391 = vunpack.c.l.b16 %v110
    %v392 = vunpack.c.h.b16 %v110
    %v393 = vunpack.c.l.b16 %v111
    %v394 = vunpack.c.h.b16 %v111
    %v395 = vunpack.c.l.b16 %v112
    %v396 = vunpack.c.h.b16 %v112
    %v397 = vunpack.c.l.b16 %v113
    %v398 = vunpack.c.h.b16 %v113
    %v399 = vunpack.c.l.b16 %v114
    %v400 = vunpack.c.h.b16 %v114
    %v401 = vunpack.c.l.b16 %v115
    %v402 = vunpack.c.h.b16 %v115
    %v403 = vunpack.c.l.b16 %v116
    %v404 = vunpack.c.h.b16 %v116
    %v405 = vunpack.c.l.b16 %v117
    %v406 = vunpack.c.h.b16 %v117
    %v407 = vunpack.c.l.b16 %v118
    %v408 = vunpack.c.h.b16 %v118
    %v409 = vunpack.c.l.b16 %v119
    %v410 = vunpack.c.h.b16 %v119
    %v411 = vunpack.c.l.b16 %v120
    %v412 = vunpack.c.h.b16 %v120
    %v413 = vunpack.c.l.b16 %v121
    %v414 = vunpack.c.h.b16 %v121
    %v415 = vunpack.c.l.b16 %v122
    %v416 = vunpack.c.h.b16 %v122
    %v417 = vunpack.c.l.b16 %v123
    %v418 = vunpack.c.h.b16 %v123
    %v419 = vunpack.c.l.b16 %v124
    %v420 = vunpack.c.h.b16 %v124
    %v421 = vunpack.c.l.b16 %v125
    %v422 = vunpack.c.h.b16 %v125
    %v423 = vunpack.c.l.b16 %v126
    %v424 = vunpack.c.h.b16 %v126
    %v425 = vunpack.c.l.b16 %v127
    %v426 = vunpack.c.h.b16 %v127
    %v427 = vunpack.c.l.b16 %v128
    %v428 = vunpack.c.h.b16 %v128
    %v429 = vunpack.c.l.b16 %v129
    %v430 = vunpack.c.h.b16 %v129
    %v431 = vunpack.c.l.b16 %v130
    %v432 = vunpack.c.h.b16 %v130
    %v433 = vunpack.c.l.b16 %v131
    %v434 = vunpack.c.h.b16 %v131
    %v435 = vunpack.c.l.b16 %v132
    %v436 = vunpack.c.h.b16 %v132
    %v437 = vunpack.c.l.b16 %v133
    %v438 = vunpack.c.h.b16 %v133
    %v439 = vunpack.c.l.b16 %v134
    %v440 = vunpack.c.h.b16 %v134
    %v441 = vunpack.c.l.b16 %v135
    %v442 = vunpack.c.h.b16 %v135
    %v443 = vunpack.c.l.b16 %v136
    %v444 = vunpack.c.h.b16 %v136
    %v445 = vunpack.c.l.b16 %v137
    %v446 = vunpack.c.h.b16 %v137
    %v447 = vpack.c.b16 %v257, %v255
    %v448 = vpack.c.b16 %v258, %v256
    %v449 = vpack.c.b16 %v261, %v259
    %v450 = vpack.c.b16 %v262, %v260
    %v451 = vpack.c.b16 %v265, %v263
    %v452 = vpack.c.b16 %v266, %v264
    %v453 = vpack.c.b16 %v269, %v267
    %v454 = vpack.c.b16 %v270, %v268
    %v455 = vpack.c.b16 %v273, %v271
    %v456 = vpack.c.b16 %v274, %v272
    %v457 = vpack.c.b16 %v277, %v275
    %v458 = vpack.c.b16 %v278, %v276
    %v459 = vpack.c.b16 %v281, %v279
    %v460 = vpack.c.b16 %v282, %v280
    %v461 = vpack.c.b16 %v285, %v283
    %v462 = vpack.c.b16 %v286, %v284
    %v463 = vpack.c.b16 %v289, %v287
    %v464 = vpack.c.b16 %v290, %v288
    %v465 = vpack.c.b16 %v293, %v291
    %v466 = vpack.c.b16 %v294, %v292
    %v467 = vpack.c.b16 %v297, %v295
    %v468 = vpack.c.b16 %v298, %v296
    %v469 = vpack.c.b16 %v301, %v299
    %v470 = vpack.c.b16 %v302, %v300
    %v471 = vpack.c.b16 %v305, %v303
    %v472 = vpack.c.b16 %v306, %v304
    %v473 = vpack.c.b16 %v309, %v307
    %v474 = vpack.c.b16 %v310, %v308
    %v475 = vpack.c.b16 %v313, %v311
    %v476 = vpack.c.b16 %v314, %v312
    %v477 = vpack.c.b16 %v317, %v315
    %v478 = vpack.c.b16 %v318, %v316
    %v479 = vpack.c.b16 %v321, %v319
    %v480 = vpack.c.b16 %v322, %v320
    %v481 = vpack.c.b16 %v325, %v323
    %v482 = vpack.c.b16 %v326, %v324
    %v483 = vpack.c.b16 %v329, %v327
    %v484 = vpack.c.b16 %v330, %v328
    %v485 = vpack.c.b16 %v333, %v331
    %v486 = vpack.c.b16 %v334, %v332
    %v487 = vpack.c.b16 %v337, %v335
    %v488 = vpack.c.b16 %v338, %v336
    %v489 = vpack.c.b16 %v341, %v339
    %v490 = vpack.c.b16 %v342, %v340
    %v491 = vpack.c.b16 %v345, %v343
    %v492 = vpack.c.b16 %v346, %v344
    %v493 = vpack.c.b16 %v349, %v347
    %v494 = vpack.c.b16 %v350, %v348
    %v495 = vpack.c.b16 %v353, %v351
    %v496 = vpack.c.b16 %v354, %v352
    %v497 = vpack.c.b16 %v357, %v355
    %v498 = vpack.c.b16 %v358, %v356
    %v499 = vpack.c.b16 %v361, %v359
    %v500 = vpack.c.b16 %v362, %v360
    %v501 = vpack.c.b16 %v365, %v363
    %v502 = vpack.c.b16 %v366, %v364
    %v503 = vpack.c.b16 %v369, %v367
    %v504 = vpack.c.b16 %v370, %v368
    %v505 = vpack.c.b16 %v373, %v371
    %v506 = vpack.c.b16 %v374, %v372
    %v507 = vpack.c.b16 %v377, %v375
    %v508 = vpack.c.b16 %v378, %v376
    %v509 = vpack.c.b16 %v381, %v379
    %v510 = vpack.c.b16 %v382, %v380
    %v511 = vpack.c.b16 %v385, %v383
    %v512 = vpack.c.b16 %v386, %v384
    %v513 = vpack.c.b16 %v389, %v387
    %v514 = vpack.c.b16 %v390, %v388
    %v515 = vpack.c.b16 %v393, %v391
    %v516 = vpack.c.b16 %v394, %v392
    %v517 = vpack.c.b16 %v397, %v395
    %v518 = vpack.c.b16 %v398, %v396
    %v519 = vpack.c.b16 %v401, %v399
    %v520 = vpack.c.b16 %v402, %v400
    %v521 = vpack.c.b16 %v405, %v403
    %v522 = vpack.c.b16 %v406, %v404
    %v523 = vpack.c.b16 %v409, %v407
    %v524 = vpack.c.b16 %v410, %v408
    %v525 = vpack.c.b16 %v413, %v411
    %v526 = vpack.c.b16 %v414, %v412
    %v527 = vpack.c.b16 %v417, %v415
    %v528 = vpack.c.b16 %v418, %v416
    %v529 = vpack.c.b16 %v421, %v419
    %v530 = vpack.c.b16 %v422, %v420
    %v531 = vpack.c.b16 %v425, %v423
    %v532 = vpack.c.b16 %v426, %v424
    %v533 = vpack.c.b16 %v429, %v427
    %v534 = vpack.c.b16 %v430, %v428
    %v535 = vpack.c.b16 %v433, %v431
    %v536 = vpack.c.b16 %v434, %v432
    %v537 = vpack.c.b16 %v437, %v435
    %v538 = vpack.c.b16 %v438, %v436
    %v539 = vpack.c.b16 %v441, %v439
    %v540 = vpack.c.b16 %v442, %v440
    %v541 = vpack.c.b16 %v445, %v443
    %v542 = vpack.c.b16 %v446, %v444
    %639 = vmatpush.bf16.msra.mxu0 %v461
    %640 = vmatpush.bf16.msra.mxu0 %v459
    %641 = vmatpush.bf16.msra.mxu0 %v457
    %642 = vmatpush.bf16.msra.mxu0 %v455
    %643 = vmatpush.bf16.msra.mxu0 %v453
    %644 = vmatpush.bf16.msra.mxu0 %v451
    %645 = vmatpush.bf16.msra.mxu0 %v449
    %646 = vmatpush.bf16.msra.mxu0 %v447
    %647 = vmatmul.bf16.gmra.mxu0 %v147
    %v648 = vpop.f32.mrf.mxu0
    %v649 = vadd.f32 0.0, %v648
    %v650 = vpop.f32.mrf.mxu0
    %651 = vdwg.mxu0
    %652 = vmatpush.bf16.msra.mxu0 %v477
    %653 = vmatpush.bf16.msra.mxu0 %v475
    %654 = vmatpush.bf16.msra.mxu0 %v473
    %655 = vmatpush.bf16.msra.mxu0 %v471
    %656 = vmatpush.bf16.msra.mxu0 %v469
    %657 = vmatpush.bf16.msra.mxu0 %v467
    %658 = vmatpush.bf16.msra.mxu0 %v465
    %659 = vmatpush.bf16.msra.mxu0 %v463
    %660 = vmatmul.bf16.gmra.mxu0 %v148
    %v661 = vpop.f32.mrf.mxu0
    %v662 = vadd.f32 %v649, %v661
    %v663 = vpop.f32.mrf.mxu0
    %664 = vdwg.mxu0
    %665 = vmatpush.bf16.msra.mxu0 %v493
    %666 = vmatpush.bf16.msra.mxu0 %v491
    %667 = vmatpush.bf16.msra.mxu0 %v489
    %668 = vmatpush.bf16.msra.mxu0 %v487
    %669 = vmatpush.bf16.msra.mxu0 %v485
    %670 = vmatpush.bf16.msra.mxu0 %v483
    %671 = vmatpush.bf16.msra.mxu0 %v481
    %672 = vmatpush.bf16.msra.mxu0 %v479
    %673 = vmatmul.bf16.gmra.mxu0 %v149
    %v674 = vpop.f32.mrf.mxu0
    %v675 = vadd.f32 %v662, %v674
    %v676 = vpop.f32.mrf.mxu0
    %677 = vdwg.mxu0
    %678 = vmatpush.bf16.msra.mxu0 %v509
    %679 = vmatpush.bf16.msra.mxu0 %v507
    %680 = vmatpush.bf16.msra.mxu0 %v505
    %681 = vmatpush.bf16.msra.mxu0 %v503
    %682 = vmatpush.bf16.msra.mxu0 %v501
    %683 = vmatpush.bf16.msra.mxu0 %v499
    %684 = vmatpush.bf16.msra.mxu0 %v497
    %685 = vmatpush.bf16.msra.mxu0 %v495
    %686 = vmatmul.bf16.gmra.mxu0 %v150
    %v687 = vpop.f32.mrf.mxu0
    %v688 = vadd.f32 %v675, %v687
    %v689 = vpop.f32.mrf.mxu0
    %690 = vdwg.mxu0
    %691 = vmatpush.bf16.msra.mxu0 %v525
    %692 = vmatpush.bf16.msra.mxu0 %v523
    %693 = vmatpush.bf16.msra.mxu0 %v521
    %694 = vmatpush.bf16.msra.mxu0 %v519
    %695 = vmatpush.bf16.msra.mxu0 %v517
    %696 = vmatpush.bf16.msra.mxu0 %v515
    %697 = vmatpush.bf16.msra.mxu0 %v513
    %698 = vmatpush.bf16.msra.mxu0 %v511
    %699 = vmatmul.bf16.gmra.mxu0 %v151
    %v700 = vpop.f32.mrf.mxu0
    %v701 = vadd.f32 %v688, %v700
    %v702 = vpop.f32.mrf.mxu0
    %703 = vdwg.mxu0
    %704 = vmatpush.bf16.msra.mxu0 %v541
    %705 = vmatpush.bf16.msra.mxu0 %v539
    %706 = vmatpush.bf16.msra.mxu0 %v537
    %707 = vmatpush.bf16.msra.mxu0 %v535
    %708 = vmatpush.bf16.msra.mxu0 %v533
    %709 = vmatpush.bf16.msra.mxu0 %v531
    %710 = vmatpush.bf16.msra.mxu0 %v529
    %711 = vmatpush.bf16.msra.mxu0 %v527
    %712 = vmatmul.bf16.gmra.mxu0 %v152
    %v713 = vpop.f32.mrf.mxu0
    %v714 = vadd.f32 %v701, %v713
    %v715 = vpop.f32.mrf.mxu0
    %716 = vdwg.mxu0
    %717 = vmatpush.bf16.msra.mxu0 %v462
    %718 = vmatpush.bf16.msra.mxu0 %v460
    %719 = vmatpush.bf16.msra.mxu0 %v458
    %720 = vmatpush.bf16.msra.mxu0 %v456
    %721 = vmatpush.bf16.msra.mxu0 %v454
    %722 = vmatpush.bf16.msra.mxu0 %v452
    %723 = vmatpush.bf16.msra.mxu0 %v450
    %724 = vmatpush.bf16.msra.mxu0 %v448
    %725 = vmatmul.bf16.gmra.mxu0 %v147
    %v726 = vpop.f32.mrf.mxu0
    %v727 = vadd.f32 0.0, %v726
    %v728 = vpop.f32.mrf.mxu0
    %729 = vdwg.mxu0
    %730 = vmatpush.bf16.msra.mxu0 %v478
    %731 = vmatpush.bf16.msra.mxu0 %v476
    %732 = vmatpush.bf16.msra.mxu0 %v474
    %733 = vmatpush.bf16.msra.mxu0 %v472
    %734 = vmatpush.bf16.msra.mxu0 %v470
    %735 = vmatpush.bf16.msra.mxu0 %v468
    %736 = vmatpush.bf16.msra.mxu0 %v466
    %737 = vmatpush.bf16.msra.mxu0 %v464
    %738 = vmatmul.bf16.gmra.mxu0 %v148
    %v739 = vpop.f32.mrf.mxu0
    %v740 = vadd.f32 %v727, %v739
    %v741 = vpop.f32.mrf.mxu0
    %742 = vdwg.mxu0
    %743 = vmatpush.bf16.msra.mxu0 %v494
    %744 = vmatpush.bf16.msra.mxu0 %v492
    %745 = vmatpush.bf16.msra.mxu0 %v490
    %746 = vmatpush.bf16.msra.mxu0 %v488
    %747 = vmatpush.bf16.msra.mxu0 %v486
    %748 = vmatpush.bf16.msra.mxu0 %v484
    %749 = vmatpush.bf16.msra.mxu0 %v482
    %750 = vmatpush.bf16.msra.mxu0 %v480
    %751 = vmatmul.bf16.gmra.mxu0 %v149
    %v752 = vpop.f32.mrf.mxu0
    %v753 = vadd.f32 %v740, %v752
    %v754 = vpop.f32.mrf.mxu0
    %755 = vdwg.mxu0
    %756 = vmatpush.bf16.msra.mxu0 %v510
    %757 = vmatpush.bf16.msra.mxu0 %v508
    %758 = vmatpush.bf16.msra.mxu0 %v506
    %759 = vmatpush.bf16.msra.mxu0 %v504
    %760 = vmatpush.bf16.msra.mxu0 %v502
    %761 = vmatpush.bf16.msra.mxu0 %v500
    %762 = vmatpush.bf16.msra.mxu0 %v498
    %763 = vmatpush.bf16.msra.mxu0 %v496
    %764 = vmatmul.bf16.gmra.mxu0 %v150
    %v765 = vpop.f32.mrf.mxu0
    %v766 = vadd.f32 %v753, %v765
    %v767 = vpop.f32.mrf.mxu0
    %768 = vdwg.mxu0
    %769 = vmatpush.bf16.msra.mxu0 %v526
    %770 = vmatpush.bf16.msra.mxu0 %v524
    %771 = vmatpush.bf16.msra.mxu0 %v522
    %772 = vmatpush.bf16.msra.mxu0 %v520
    %773 = vmatpush.bf16.msra.mxu0 %v518
    %774 = vmatpush.bf16.msra.mxu0 %v516
    %775 = vmatpush.bf16.msra.mxu0 %v514
    %776 = vmatpush.bf16.msra.mxu0 %v512
    %777 = vmatmul.bf16.gmra.mxu0 %v151
    %v778 = vpop.f32.mrf.mxu0
    %v779 = vadd.f32 %v766, %v778
    %v780 = vpop.f32.mrf.mxu0
    %781 = vdwg.mxu0
    %782 = vmatpush.bf16.msra.mxu0 %v542
    %783 = vmatpush.bf16.msra.mxu0 %v540
    %784 = vmatpush.bf16.msra.mxu0 %v538
    %785 = vmatpush.bf16.msra.mxu0 %v536
    %786 = vmatpush.bf16.msra.mxu0 %v534
    %787 = vmatpush.bf16.msra.mxu0 %v532
    %788 = vmatpush.bf16.msra.mxu0 %v530
    %789 = vmatpush.bf16.msra.mxu0 %v528
    %790 = vmatmul.bf16.gmra.mxu0 %v152
    %v791 = vpop.f32.mrf.mxu0
    %v792 = vadd.f32 %v779, %v791
    %v793 = vpop.f32.mrf.mxu0
    %794 = vdwg.mxu0
    %v795 = vadd.f32 %v37, %v714
    %v796 = vadd.f32 %v38, %v792
    %797 = vst [vmem:[#allocation5] sm:$0xff] %v795
    %798 = vst [vmem:[#allocation5 + $0x8] sm:$0xff] %v796
    // Predicated region
    $region22: #{quantized_linear_forward.1} parent=1 // pred_check
      %p799 = pneg %p31
    $region23: #{quantized_linear_forward.1} parent=1 // pred_check_branch
      %801 = sbr.rel (%p799) target = $region25
    $region24: #{quantized_linear_forward.1} parent=1 // pred_region
      %v802 = vld [vmem:[#allocation5] sm:$0xff]
      %v803 = vld [vmem:[#allocation5 + $0x8] sm:$0xff]
      %v804 = vld [vmem:[%s2] sm:$0x3]
      %v806 = vperm.slane %v804, 0
      %v807 = vperm.slane %v804, 1
      %v810 = vadd.f32 %v802, %v806
      %v811 = vadd.f32 %v803, %v807
      %v812 = vmul.f32 %v810, 0.05
      %v813 = vmul.f32 %v811, 0.05
      %814 = vst [vmem:[#allocation5] sm:$0xff] %v812
      %815 = vst [vmem:[#allocation5 + $0x8] sm:$0xff] %v813
    $region25: #{quantized_linear_forward.1} parent=1 // pred_fallthru
      _
    // Predicated region
    $region26: #{quantized_linear_forward.1} parent=1 // pred_check
      _
    $region27: #{quantized_linear_forward.1} parent=1 // pred_check_branch
      %817 = sbr.rel (0) target = $region29
    $region28: #{quantized_linear_forward.1} parent=1 // pred_region
      %819 = vsyncadd [#allocation4], 0
      %s821 = sshll.u32 [#allocation5], 4
      %s822 = int_to_ptr.vmem [resolvable:$true] %s821
      %s823 = sshll.u32 %s3, 4
      %s824 = int_to_ptr.hbm [resolvable:$true] %s823
      %826 = dma.vmem_to_hbm [thread:$0]  %s822, 256, %s824, [#allocation4]
    $region29: #{quantized_linear_forward.1} parent=1 // pred_fallthru
      _
    // Predicated region
    $region30: #{quantized_linear_forward.1} parent=1 // pred_check
      _
    $region31: #{quantized_linear_forward.1} parent=1 // pred_check_branch
      %828 = sbr.rel (0) target = $region33
    $region32: #{quantized_linear_forward.1} parent=1 // pred_region
      %830 = dma.done [#allocation4], 256
    $region33: #{quantized_linear_forward.1} parent=1 // pred_fallthru
      _
    %831 = vsyncpa [#allocation3], 1
    %832 = vsyncpa [#allocation4], 1

// kernel: quantized_linear_forward.1
$region0: #{quantized_linear_forward.1}
  #allocation0 [shape = 'u32[]', space=smem, size = 0x4, offset = 0x4, fixed_abs, tag = 'smem constant byte address 0x4 - core index']
  #allocation1 [shape = 'u32[72,128]{1,0:T(1,128)}', space=vmem, size = 0x9000, scoped, tag = 'internal scratch']
  %s0 = inlined_call_operand.vmem [shape: bf16[8,768], index: 0, kind: input, shape index: {}]
  %s1 = inlined_call_operand.hbm [shape: bf16[768,256], index: 1, kind: input, shape index: {}]
  %s2 = inlined_call_operand.vmem [shape: f32[1,256], index: 2, kind: input, shape index: {}]
  %s3 = inlined_call_operand.hbm [shape: f32[8,256], index: 3, kind: output, shape index: {}]
  %s4 = sld [smem:[#allocation0]]
  $region34: #{quantized_linear_forward.1} parent=0
    _
  %s6 = ssub.s32 1, %s4
  %s7 = scalar_select 0, %s6, %s4
  $region1: #{quantized_linear_forward.1} parent=0
    #allocation2 [shape = 'u8[393216]{0}', space=vmem, size = 0x60000, scoped, tag = 'input window, operand 1, single buffered']
    #allocation3 [shape = 's32[1]{0}', space=sflag, size = 0x4, scoped, tag = 'scoped memory for quantized_linear_forward.1']
    #allocation4 [shape = 's32[1]{0}', space=sflag, size = 0x4, scoped, tag = 'scoped memory for quantized_linear_forward.1']
    #allocation5 [shape = 'u8[8192]{0}', space=vmem, size = 0x2000, scoped, tag = 'output window, operand 0, single buffered']
    %8 = vsyncpa [#allocation3], 0
    %9 = vsyncpa [#allocation4], 0
    // Predicated region
    $region2: #{quantized_linear_forward.1} parent=1 // pred_check
      _
    $region3: #{quantized_linear_forward.1} parent=1 // pred_check_branch
      %11 = sbr.rel (0) target = $region5
    $region4: #{quantized_linear_forward.1} parent=1 // pred_region
      _
    $region5: #{quantized_linear_forward.1} parent=1 // pred_fallthru
      _
    // Predicated region
    $region6: #{quantized_linear_forward.1} parent=1 // pred_check
      _
    $region7: #{quantized_linear_forward.1} parent=1 // pred_check_branch
      %13 = sbr.rel (0) target = $region9
    $region8: #{quantized_linear_forward.1} parent=1 // pred_region
      %15 = vsyncadd [#allocation3], 0
      %s16 = sshll.u32 %s1, 4
      %s17 = int_to_ptr.hbm [resolvable:$true] %s16
      %s18 = sshll.u32 [#allocation2], 4
      %s19 = int_to_ptr.vmem [resolvable:$true] %s18
      %24 = dma.hbm_to_vmem [thread:$0]  %s17, 12288, %s19, [#allocation3], 128, 128, 8
    $region9: #{quantized_linear_forward.1} parent=1 // pred_fallthru
      _
    // Predicated region
    $region10: #{quantized_linear_forward.1} parent=1 // pred_check
      _
    $region11: #{quantized_linear_forward.1} parent=1 // pred_check_branch
      %26 = sbr.rel (0) target = $region13
    $region12: #{quantized_linear_forward.1} parent=1 // pred_region
      _
    $region13: #{quantized_linear_forward.1} parent=1 // pred_fallthru
      _
    // Predicated region
    $region14: #{quantized_linear_forward.1} parent=1 // pred_check
      _
    $region15: #{quantized_linear_forward.1} parent=1 // pred_check_branch
      %28 = sbr.rel (0) target = $region17
    $region16: #{quantized_linear_forward.1} parent=1 // pred_region
      %30 = dma.done [#allocation3], 12288
    $region17: #{quantized_linear_forward.1} parent=1 // pred_fallthru
      _
    %p31 = scmp.eq.s32.totalorder 0, 0
    // Predicated region
    $region18: #{quantized_linear_forward.1} parent=1 // pred_check
      %p32 = pneg %p31
    $region19: #{quantized_linear_forward.1} parent=1 // pred_check_branch
      %34 = sbr.rel (%p32) target = $region21
    $region20: #{quantized_linear_forward.1} parent=1 // pred_region
      %35 = vst [vmem:[#allocation5] sm:$0xff] 0.0
      %36 = vst [vmem:[#allocation5 + $0x8] sm:$0xff] 0.0
    $region21: #{quantized_linear_forward.1} parent=1 // pred_fallthru
      _
    %v37 = vld [vmem:[#allocation5] sm:$0xff]
    %v38 = vld [vmem:[#allocation5 + $0x8] sm:$0xff]
    %v39 = vld [vmem:[%s0] sm:$0xff]
    %v40 = vld [vmem:[%s0 + $0x8] sm:$0xff]
    %v41 = vld [vmem:[%s0 + $0x10] sm:$0xff]
    %v42 = vld [vmem:[#allocation2] sm:$0xff]
    %v43 = vld [vmem:[#allocation2 + $0x8] sm:$0xff]
    %v44 = vld [vmem:[#allocation2 + $0x10] sm:$0xff]
    %v45 = vld [vmem:[#allocation2 + $0x18] sm:$0xff]
    %v46 = vld [vmem:[#allocation2 + $0x20] sm:$0xff]
    %v47 = vld [vmem:[#allocation2 + $0x28] sm:$0xff]
    %v48 = vld [vmem:[#allocation2 + $0x30] sm:$0xff]
    %v49 = vld [vmem:[#allocation2 + $0x38] sm:$0xff]
    %v50 = vld [vmem:[#allocation2 + $0x40] sm:$0xff]
    %v51 = vld [vmem:[#allocation2 + $0x48] sm:$0xff]
    %v52 = vld [vmem:[#allocation2 + $0x50] sm:$0xff]
    %v53 = vld [vmem:[#allocation2 + $0x58] sm:$0xff]
    %v54 = vld [vmem:[#allocation2 + $0x60] sm:$0xff]
    %v55 = vld [vmem:[#allocation2 + $0x68] sm:$0xff]
    %v56 = vld [vmem:[#allocation2 + $0x70] sm:$0xff]
    %v57 = vld [vmem:[#allocation2 + $0x78] sm:$0xff]
    %v58 = vld [vmem:[#allocation2 + $0x80] sm:$0xff]
    %v59 = vld [vmem:[#allocation2 + $0x88] sm:$0xff]
    %v60 = vld [vmem:[#allocation2 + $0x90] sm:$0xff]
    %v61 = vld [vmem:[#allocation2 + $0x98] sm:$0xff]
    %v62 = vld [vmem:[#allocation2 + $0xa0] sm:$0xff]
    %v63 = vld [vmem:[#allocation2 + $0xa8] sm:$0xff]
    %v64 = vld [vmem:[#allocation2 + $0xb0] sm:$0xff]
    %v65 = vld [vmem:[#allocation2 + $0xb8] sm:$0xff]
    %v66 = vld [vmem:[#allocation2 + $0xc0] sm:$0xff]
    %v67 = vld [vmem:[#allocation2 + $0xc8] sm:$0xff]
    %v68 = vld [vmem:[#allocation2 + $0xd0] sm:$0xff]
    %v69 = vld [vmem:[#allocation2 + $0xd8] sm:$0xff]
    %v70 = vld [vmem:[#allocation2 + $0xe0] sm:$0xff]
    %v71 = vld [vmem:[#allocation2 + $0xe8] sm:$0xff]
    %v72 = vld [vmem:[#allocation2 + $0xf0] sm:$0xff]
    %v73 = vld [vmem:[#allocation2 + $0xf8] sm:$0xff]
    %v74 = vld [vmem:[#allocation2 + $0x100] sm:$0xff]
    %v75 = vld [vmem:[#allocation2 + $0x108] sm:$0xff]
    %v76 = vld [vmem:[#allocation2 + $0x110] sm:$0xff]
    %v77 = vld [vmem:[#allocation2 + $0x118] sm:$0xff]
    %v78 = vld [vmem:[#allocation2 + $0x120] sm:$0xff]
    %v79 = vld [vmem:[#allocation2 + $0x128] sm:$0xff]
    %v80 = vld [vmem:[#allocation2 + $0x130] sm:$0xff]
    %v81 = vld [vmem:[#allocation2 + $0x138] sm:$0xff]
    %v82 = vld [vmem:[#allocation2 + $0x140] sm:$0xff]
    %v83 = vld [vmem:[#allocation2 + $0x148] sm:$0xff]
    %v84 = vld [vmem:[#allocation2 + $0x150] sm:$0xff]
    %v85 = vld [vmem:[#allocation2 + $0x158] sm:$0xff]
    %v86 = vld [vmem:[#allocation2 + $0x160] sm:$0xff]
    %v87 = vld [vmem:[#allocation2 + $0x168] sm:$0xff]
    %v88 = vld [vmem:[#allocation2 + $0x170] sm:$0xff]
    %v89 = vld [vmem:[#allocation2 + $0x178] sm:$0xff]
    %v90 = vld [vmem:[#allocation2 + $0x180] sm:$0xff]
    %v91 = vld [vmem:[#allocation2 + $0x188] sm:$0xff]
    %v92 = vld [vmem:[#allocation2 + $0x190] sm:$0xff]
    %v93 = vld [vmem:[#allocation2 + $0x198] sm:$0xff]
    %v94 = vld [vmem:[#allocation2 + $0x1a0] sm:$0xff]
    %v95 = vld [vmem:[#allocation2 + $0x1a8] sm:$0xff]
    %v96 = vld [vmem:[#allocation2 + $0x1b0] sm:$0xff]
    %v97 = vld [vmem:[#allocation2 + $0x1b8] sm:$0xff]
    %v98 = vld [vmem:[#allocation2 + $0x1c0] sm:$0xff]
    %v99 = vld [vmem:[#allocation2 + $0x1c8] sm:$0xff]
    %v100 = vld [vmem:[#allocation2 + $0x1d0] sm:$0xff]
    %v101 = vld [vmem:[#allocation2 + $0x1d8] sm:$0xff]
    %v102 = vld [vmem:[#allocation2 + $0x1e0] sm:$0xff]
    %v103 = vld [vmem:[#allocation2 + $0x1e8] sm:$0xff]
    %v104 = vld [vmem:[#allocation2 + $0x1f0] sm:$0xff]
    %v105 = vld [vmem:[#allocation2 + $0x1f8] sm:$0xff]
    %v106 = vld [vmem:[#allocation2 + $0x200] sm:$0xff]
    %v107 = vld [vmem:[#allocation2 + $0x208] sm:$0xff]
    %v108 = vld [vmem:[#allocation2 + $0x210] sm:$0xff]
    %v109 = vld [vmem:[#allocation2 + $0x218] sm:$0xff]
    %v110 = vld [vmem:[#allocation2 + $0x220] sm:$0xff]
    %v111 = vld [vmem:[#allocation2 + $0x228] sm:$0xff]
    %v112 = vld [vmem:[#allocation2 + $0x230] sm:$0xff]
    %v113 = vld [vmem:[#allocation2 + $0x238] sm:$0xff]
    %v114 = vld [vmem:[#allocation2 + $0x240] sm:$0xff]
    %v115 = vld [vmem:[#allocation2 + $0x248] sm:$0xff]
    %v116 = vld [vmem:[#allocation2 + $0x250] sm:$0xff]
    %v117 = vld [vmem:[#allocation2 + $0x258] sm:$0xff]
    %v118 = vld [vmem:[#allocation2 + $0x260] sm:$0xff]
    %v119 = vld [vmem:[#allocation2 + $0x268] sm:$0xff]
    %v120 = vld [vmem:[#allocation2 + $0x270] sm:$0xff]
    %v121 = vld [vmem:[#allocation2 + $0x278] sm:$0xff]
    %v122 = vld [vmem:[#allocation2 + $0x280] sm:$0xff]
    %v123 = vld [vmem:[#allocation2 + $0x288] sm:$0xff]
    %v124 = vld [vmem:[#allocation2 + $0x290] sm:$0xff]
    %v125 = vld [vmem:[#allocation2 + $0x298] sm:$0xff]
    %v126 = vld [vmem:[#allocation2 + $0x2a0] sm:$0xff]
    %v127 = vld [vmem:[#allocation2 + $0x2a8] sm:$0xff]
    %v128 = vld [vmem:[#allocation2 + $0x2b0] sm:$0xff]
    %v129 = vld [vmem:[#allocation2 + $0x2b8] sm:$0xff]
    %v130 = vld [vmem:[#allocation2 + $0x2c0] sm:$0xff]
    %v131 = vld [vmem:[#allocation2 + $0x2c8] sm:$0xff]
    %v132 = vld [vmem:[#allocation2 + $0x2d0] sm:$0xff]
    %v133 = vld [vmem:[#allocation2 + $0x2d8] sm:$0xff]
    %v134 = vld [vmem:[#allocation2 + $0x2e0] sm:$0xff]
    %v135 = vld [vmem:[#allocation2 + $0x2e8] sm:$0xff]
    %v136 = vld [vmem:[#allocation2 + $0x2f0] sm:$0xff]
    %v137 = vld [vmem:[#allocation2 + $0x2f8] sm:$0xff]
    %v141 = vunpack.c.l.b16 %v39
    %v142 = vunpack.c.h.b16 %v39
    %v143 = vunpack.c.l.b16 %v40
    %v144 = vunpack.c.h.b16 %v40
    %v145 = vunpack.c.l.b16 %v41
    %v146 = vunpack.c.h.b16 %v41
    %v147 = vpack.c.b16 %v141, %v141
    %v148 = vpack.c.b16 %v142, %v142
    %v149 = vpack.c.b16 %v143, %v143
    %v150 = vpack.c.b16 %v144, %v144
    %v151 = vpack.c.b16 %v145, %v145
    %v152 = vpack.c.b16 %v146, %v146
    %v255 = vunpack.c.l.b16 %v42
    %v256 = vunpack.c.h.b16 %v42
    %v257 = vunpack.c.l.b16 %v43
    %v258 = vunpack.c.h.b16 %v43
    %v259 = vunpack.c.l.b16 %v44
    %v260 = vunpack.c.h.b16 %v44
    %v261 = vunpack.c.l.b16 %v45
    %v262 = vunpack.c.h.b16 %v45
    %v263 = vunpack.c.l.b16 %v46
    %v264 = vunpack.c.h.b16 %v46
    %v265 = vunpack.c.l.b16 %v47
    %v266 = vunpack.c.h.b16 %v47
    %v267 = vunpack.c.l.b16 %v48
    %v268 = vunpack.c.h.b16 %v48
    %v269 = vunpack.c.l.b16 %v49
    %v270 = vunpack.c.h.b16 %v49
    %v271 = vunpack.c.l.b16 %v50
    %v272 = vunpack.c.h.b16 %v50
    %v273 = vunpack.c.l.b16 %v51
    %v274 = vunpack.c.h.b16 %v51
    %v275 = vunpack.c.l.b16 %v52
    %v276 = vunpack.c.h.b16 %v52
    %v277 = vunpack.c.l.b16 %v53
    %v278 = vunpack.c.h.b16 %v53
    %v279 = vunpack.c.l.b16 %v54
    %v280 = vunpack.c.h.b16 %v54
    %v281 = vunpack.c.l.b16 %v55
    %v282 = vunpack.c.h.b16 %v55
    %v283 = vunpack.c.l.b16 %v56
    %v284 = vunpack.c.h.b16 %v56
    %v285 = vunpack.c.l.b16 %v57
    %v286 = vunpack.c.h.b16 %v57
    %v287 = vunpack.c.l.b16 %v58
    %v288 = vunpack.c.h.b16 %v58
    %v289 = vunpack.c.l.b16 %v59
    %v290 = vunpack.c.h.b16 %v59
    %v291 = vunpack.c.l.b16 %v60
    %v292 = vunpack.c.h.b16 %v60
    %v293 = vunpack.c.l.b16 %v61
    %v294 = vunpack.c.h.b16 %v61
    %v295 = vunpack.c.l.b16 %v62
    %v296 = vunpack.c.h.b16 %v62
    %v297 = vunpack.c.l.b16 %v63
    %v298 = vunpack.c.h.b16 %v63
    %v299 = vunpack.c.l.b16 %v64
    %v300 = vunpack.c.h.b16 %v64
    %v301 = vunpack.c.l.b16 %v65
    %v302 = vunpack.c.h.b16 %v65
    %v303 = vunpack.c.l.b16 %v66
    %v304 = vunpack.c.h.b16 %v66
    %v305 = vunpack.c.l.b16 %v67
    %v306 = vunpack.c.h.b16 %v67
    %v307 = vunpack.c.l.b16 %v68
    %v308 = vunpack.c.h.b16 %v68
    %v309 = vunpack.c.l.b16 %v69
    %v310 = vunpack.c.h.b16 %v69
    %v311 = vunpack.c.l.b16 %v70
    %v312 = vunpack.c.h.b16 %v70
    %v313 = vunpack.c.l.b16 %v71
    %v314 = vunpack.c.h.b16 %v71
    %v315 = vunpack.c.l.b16 %v72
    %v316 = vunpack.c.h.b16 %v72
    %v317 = vunpack.c.l.b16 %v73
    %v318 = vunpack.c.h.b16 %v73
    %v319 = vunpack.c.l.b16 %v74
    %v320 = vunpack.c.h.b16 %v74
    %v321 = vunpack.c.l.b16 %v75
    %v322 = vunpack.c.h.b16 %v75
    %v323 = vunpack.c.l.b16 %v76
    %v324 = vunpack.c.h.b16 %v76
    %v325 = vunpack.c.l.b16 %v77
    %v326 = vunpack.c.h.b16 %v77
    %v327 = vunpack.c.l.b16 %v78
    %v328 = vunpack.c.h.b16 %v78
    %v329 = vunpack.c.l.b16 %v79
    %v330 = vunpack.c.h.b16 %v79
    %v331 = vunpack.c.l.b16 %v80
    %v332 = vunpack.c.h.b16 %v80
    %v333 = vunpack.c.l.b16 %v81
    %v334 = vunpack.c.h.b16 %v81
    %v335 = vunpack.c.l.b16 %v82
    %v336 = vunpack.c.h.b16 %v82
    %v337 = vunpack.c.l.b16 %v83
    %v338 = vunpack.c.h.b16 %v83
    %v339 = vunpack.c.l.b16 %v84
    %v340 = vunpack.c.h.b16 %v84
    %v341 = vunpack.c.l.b16 %v85
    %v342 = vunpack.c.h.b16 %v85
    %v343 = vunpack.c.l.b16 %v86
    %v344 = vunpack.c.h.b16 %v86
    %v345 = vunpack.c.l.b16 %v87
    %v346 = vunpack.c.h.b16 %v87
    %v347 = vunpack.c.l.b16 %v88
    %v348 = vunpack.c.h.b16 %v88
    %v349 = vunpack.c.l.b16 %v89
    %v350 = vunpack.c.h.b16 %v89
    %v351 = vunpack.c.l.b16 %v90
    %v352 = vunpack.c.h.b16 %v90
    %v353 = vunpack.c.l.b16 %v91
    %v354 = vunpack.c.h.b16 %v91
    %v355 = vunpack.c.l.b16 %v92
    %v356 = vunpack.c.h.b16 %v92
    %v357 = vunpack.c.l.b16 %v93
    %v358 = vunpack.c.h.b16 %v93
    %v359 = vunpack.c.l.b16 %v94
    %v360 = vunpack.c.h.b16 %v94
    %v361 = vunpack.c.l.b16 %v95
    %v362 = vunpack.c.h.b16 %v95
    %v363 = vunpack.c.l.b16 %v96
    %v364 = vunpack.c.h.b16 %v96
    %v365 = vunpack.c.l.b16 %v97
    %v366 = vunpack.c.h.b16 %v97
    %v367 = vunpack.c.l.b16 %v98
    %v368 = vunpack.c.h.b16 %v98
    %v369 = vunpack.c.l.b16 %v99
    %v370 = vunpack.c.h.b16 %v99
    %v371 = vunpack.c.l.b16 %v100
    %v372 = vunpack.c.h.b16 %v100
    %v373 = vunpack.c.l.b16 %v101
    %v374 = vunpack.c.h.b16 %v101
    %v375 = vunpack.c.l.b16 %v102
    %v376 = vunpack.c.h.b16 %v102
    %v377 = vunpack.c.l.b16 %v103
    %v378 = vunpack.c.h.b16 %v103
    %v379 = vunpack.c.l.b16 %v104
    %v380 = vunpack.c.h.b16 %v104
    %v381 = vunpack.c.l.b16 %v105
    %v382 = vunpack.c.h.b16 %v105
    %v383 = vunpack.c.l.b16 %v106
    %v384 = vunpack.c.h.b16 %v106
    %v385 = vunpack.c.l.b16 %v107
    %v386 = vunpack.c.h.b16 %v107
    %v387 = vunpack.c.l.b16 %v108
    %v388 = vunpack.c.h.b16 %v108
    %v389 = vunpack.c.l.b16 %v109
    %v390 = vunpack.c.h.b16 %v109
    %v391 = vunpack.c.l.b16 %v110
    %v392 = vunpack.c.h.b16 %v110
    %v393 = vunpack.c.l.b16 %v111
    %v394 = vunpack.c.h.b16 %v111
    %v395 = vunpack.c.l.b16 %v112
    %v396 = vunpack.c.h.b16 %v112
    %v397 = vunpack.c.l.b16 %v113
    %v398 = vunpack.c.h.b16 %v113
    %v399 = vunpack.c.l.b16 %v114
    %v400 = vunpack.c.h.b16 %v114
    %v401 = vunpack.c.l.b16 %v115
    %v402 = vunpack.c.h.b16 %v115
    %v403 = vunpack.c.l.b16 %v116
    %v404 = vunpack.c.h.b16 %v116
    %v405 = vunpack.c.l.b16 %v117
    %v406 = vunpack.c.h.b16 %v117
    %v407 = vunpack.c.l.b16 %v118
    %v408 = vunpack.c.h.b16 %v118
    %v409 = vunpack.c.l.b16 %v119
    %v410 = vunpack.c.h.b16 %v119
    %v411 = vunpack.c.l.b16 %v120
    %v412 = vunpack.c.h.b16 %v120
    %v413 = vunpack.c.l.b16 %v121
    %v414 = vunpack.c.h.b16 %v121
    %v415 = vunpack.c.l.b16 %v122
    %v416 = vunpack.c.h.b16 %v122
    %v417 = vunpack.c.l.b16 %v123
    %v418 = vunpack.c.h.b16 %v123
    %v419 = vunpack.c.l.b16 %v124
    %v420 = vunpack.c.h.b16 %v124
    %v421 = vunpack.c.l.b16 %v125
    %v422 = vunpack.c.h.b16 %v125
    %v423 = vunpack.c.l.b16 %v126
    %v424 = vunpack.c.h.b16 %v126
    %v425 = vunpack.c.l.b16 %v127
    %v426 = vunpack.c.h.b16 %v127
    %v427 = vunpack.c.l.b16 %v128
    %v428 = vunpack.c.h.b16 %v128
    %v429 = vunpack.c.l.b16 %v129
    %v430 = vunpack.c.h.b16 %v129
    %v431 = vunpack.c.l.b16 %v130
    %v432 = vunpack.c.h.b16 %v130
    %v433 = vunpack.c.l.b16 %v131
    %v434 = vunpack.c.h.b16 %v131
    %v435 = vunpack.c.l.b16 %v132
    %v436 = vunpack.c.h.b16 %v132
    %v437 = vunpack.c.l.b16 %v133
    %v438 = vunpack.c.h.b16 %v133
    %v439 = vunpack.c.l.b16 %v134
    %v440 = vunpack.c.h.b16 %v134
    %v441 = vunpack.c.l.b16 %v135
    %v442 = vunpack.c.h.b16 %v135
    %v443 = vunpack.c.l.b16 %v136
    %v444 = vunpack.c.h.b16 %v136
    %v445 = vunpack.c.l.b16 %v137
    %v446 = vunpack.c.h.b16 %v137
    %v447 = vpack.c.b16 %v257, %v255
    %v448 = vpack.c.b16 %v258, %v256
    %v449 = vpack.c.b16 %v261, %v259
    %v450 = vpack.c.b16 %v262, %v260
    %v451 = vpack.c.b16 %v265, %v263
    %v452 = vpack.c.b16 %v266, %v264
    %v453 = vpack.c.b16 %v269, %v267
    %v454 = vpack.c.b16 %v270, %v268
    %v455 = vpack.c.b16 %v273, %v271
    %v456 = vpack.c.b16 %v274, %v272
    %v457 = vpack.c.b16 %v277, %v275
    %v458 = vpack.c.b16 %v278, %v276
    %v459 = vpack.c.b16 %v281, %v279
    %v460 = vpack.c.b16 %v282, %v280
    %v461 = vpack.c.b16 %v285, %v283
    %v462 = vpack.c.b16 %v286, %v284
    %v463 = vpack.c.b16 %v289, %v287
    %v464 = vpack.c.b16 %v290, %v288
    %v465 = vpack.c.b16 %v293, %v291
    %v466 = vpack.c.b16 %v294, %v292
    %v467 = vpack.c.b16 %v297, %v295
    %v468 = vpack.c.b16 %v298, %v296
    %v469 = vpack.c.b16 %v301, %v299
    %v470 = vpack.c.b16 %v302, %v300
    %v471 = vpack.c.b16 %v305, %v303
    %v472 = vpack.c.b16 %v306, %v304
    %v473 = vpack.c.b16 %v309, %v307
    %v474 = vpack.c.b16 %v310, %v308
    %v475 = vpack.c.b16 %v313, %v311
    %v476 = vpack.c.b16 %v314, %v312
    %v477 = vpack.c.b16 %v317, %v315
    %v478 = vpack.c.b16 %v318, %v316
    %v479 = vpack.c.b16 %v321, %v319
    %v480 = vpack.c.b16 %v322, %v320
    %v481 = vpack.c.b16 %v325, %v323
    %v482 = vpack.c.b16 %v326, %v324
    %v483 = vpack.c.b16 %v329, %v327
    %v484 = vpack.c.b16 %v330, %v328
    %v485 = vpack.c.b16 %v333, %v331
    %v486 = vpack.c.b16 %v334, %v332
    %v487 = vpack.c.b16 %v337, %v335
    %v488 = vpack.c.b16 %v338, %v336
    %v489 = vpack.c.b16 %v341, %v339
    %v490 = vpack.c.b16 %v342, %v340
    %v491 = vpack.c.b16 %v345, %v343
    %v492 = vpack.c.b16 %v346, %v344
    %v493 = vpack.c.b16 %v349, %v347
    %v494 = vpack.c.b16 %v350, %v348
    %v495 = vpack.c.b16 %v353, %v351
    %v496 = vpack.c.b16 %v354, %v352
    %v497 = vpack.c.b16 %v357, %v355
    %v498 = vpack.c.b16 %v358, %v356
    %v499 = vpack.c.b16 %v361, %v359
    %v500 = vpack.c.b16 %v362, %v360
    %v501 = vpack.c.b16 %v365, %v363
    %v502 = vpack.c.b16 %v366, %v364
    %v503 = vpack.c.b16 %v369, %v367
    %v504 = vpack.c.b16 %v370, %v368
    %v505 = vpack.c.b16 %v373, %v371
    %v506 = vpack.c.b16 %v374, %v372
    %v507 = vpack.c.b16 %v377, %v375
    %v508 = vpack.c.b16 %v378, %v376
    %v509 = vpack.c.b16 %v381, %v379
    %v510 = vpack.c.b16 %v382, %v380
    %v511 = vpack.c.b16 %v385, %v383
    %v512 = vpack.c.b16 %v386, %v384
    %v513 = vpack.c.b16 %v389, %v387
    %v514 = vpack.c.b16 %v390, %v388
    %v515 = vpack.c.b16 %v393, %v391
    %v516 = vpack.c.b16 %v394, %v392
    %v517 = vpack.c.b16 %v397, %v395
    %v518 = vpack.c.b16 %v398, %v396
    %v519 = vpack.c.b16 %v401, %v399
    %v520 = vpack.c.b16 %v402, %v400
    %v521 = vpack.c.b16 %v405, %v403
    %v522 = vpack.c.b16 %v406, %v404
    %v523 = vpack.c.b16 %v409, %v407
    %v524 = vpack.c.b16 %v410, %v408
    %v525 = vpack.c.b16 %v413, %v411
    %v526 = vpack.c.b16 %v414, %v412
    %v527 = vpack.c.b16 %v417, %v415
    %v528 = vpack.c.b16 %v418, %v416
    %v529 = vpack.c.b16 %v421, %v419
    %v530 = vpack.c.b16 %v422, %v420
    %v531 = vpack.c.b16 %v425, %v423
    %v532 = vpack.c.b16 %v426, %v424
    %v533 = vpack.c.b16 %v429, %v427
    %v534 = vpack.c.b16 %v430, %v428
    %v535 = vpack.c.b16 %v433, %v431
    %v536 = vpack.c.b16 %v434, %v432
    %v537 = vpack.c.b16 %v437, %v435
    %v538 = vpack.c.b16 %v438, %v436
    %v539 = vpack.c.b16 %v441, %v439
    %v540 = vpack.c.b16 %v442, %v440
    %v541 = vpack.c.b16 %v445, %v443
    %v542 = vpack.c.b16 %v446, %v444
    %639 = vmatpush.bf16.msra.mxu0 %v461
    %640 = vmatpush.bf16.msra.mxu0 %v459
    %641 = vmatpush.bf16.msra.mxu0 %v457
    %642 = vmatpush.bf16.msra.mxu0 %v455
    %643 = vmatpush.bf16.msra.mxu0 %v453
    %644 = vmatpush.bf16.msra.mxu0 %v451
    %645 = vmatpush.bf16.msra.mxu0 %v449
    %646 = vmatpush.bf16.msra.mxu0 %v447
    %647 = vmatmul.bf16.gmra.mxu0 %v147
    %v648 = vpop.f32.mrf.mxu0
    %v649 = vadd.f32 0.0, %v648
    %v650 = vpop.f32.mrf.mxu0
    %651 = vdwg.mxu0
    %652 = vmatpush.bf16.msra.mxu0 %v477
    %653 = vmatpush.bf16.msra.mxu0 %v475
    %654 = vmatpush.bf16.msra.mxu0 %v473
    %655 = vmatpush.bf16.msra.mxu0 %v471
    %656 = vmatpush.bf16.msra.mxu0 %v469
    %657 = vmatpush.bf16.msra.mxu0 %v467
    %658 = vmatpush.bf16.msra.mxu0 %v465
    %659 = vmatpush.bf16.msra.mxu0 %v463
    %660 = vmatmul.bf16.gmra.mxu0 %v148
    %v661 = vpop.f32.mrf.mxu0
    %v662 = vadd.f32 %v649, %v661
    %v663 = vpop.f32.mrf.mxu0
    %664 = vdwg.mxu0
    %665 = vmatpush.bf16.msra.mxu0 %v493
    %666 = vmatpush.bf16.msra.mxu0 %v491
    %667 = vmatpush.bf16.msra.mxu0 %v489
    %668 = vmatpush.bf16.msra.mxu0 %v487
    %669 = vmatpush.bf16.msra.mxu0 %v485
    %670 = vmatpush.bf16.msra.mxu0 %v483
    %671 = vmatpush.bf16.msra.mxu0 %v481
    %672 = vmatpush.bf16.msra.mxu0 %v479
    %673 = vmatmul.bf16.gmra.mxu0 %v149
    %v674 = vpop.f32.mrf.mxu0
    %v675 = vadd.f32 %v662, %v674
    %v676 = vpop.f32.mrf.mxu0
    %677 = vdwg.mxu0
    %678 = vmatpush.bf16.msra.mxu0 %v509
    %679 = vmatpush.bf16.msra.mxu0 %v507
    %680 = vmatpush.bf16.msra.mxu0 %v505
    %681 = vmatpush.bf16.msra.mxu0 %v503
    %682 = vmatpush.bf16.msra.mxu0 %v501
    %683 = vmatpush.bf16.msra.mxu0 %v499
    %684 = vmatpush.bf16.msra.mxu0 %v497
    %685 = vmatpush.bf16.msra.mxu0 %v495
    %686 = vmatmul.bf16.gmra.mxu0 %v150
    %v687 = vpop.f32.mrf.mxu0
    %v688 = vadd.f32 %v675, %v687
    %v689 = vpop.f32.mrf.mxu0
    %690 = vdwg.mxu0
    %691 = vmatpush.bf16.msra.mxu0 %v525
    %692 = vmatpush.bf16.msra.mxu0 %v523
    %693 = vmatpush.bf16.msra.mxu0 %v521
    %694 = vmatpush.bf16.msra.mxu0 %v519
    %695 = vmatpush.bf16.msra.mxu0 %v517
    %696 = vmatpush.bf16.msra.mxu0 %v515
    %697 = vmatpush.bf16.msra.mxu0 %v513
    %698 = vmatpush.bf16.msra.mxu0 %v511
    %699 = vmatmul.bf16.gmra.mxu0 %v151
    %v700 = vpop.f32.mrf.mxu0
    %v701 = vadd.f32 %v688, %v700
    %v702 = vpop.f32.mrf.mxu0
    %703 = vdwg.mxu0
    %704 = vmatpush.bf16.msra.mxu0 %v541
    %705 = vmatpush.bf16.msra.mxu0 %v539
    %706 = vmatpush.bf16.msra.mxu0 %v537
    %707 = vmatpush.bf16.msra.mxu0 %v535
    %708 = vmatpush.bf16.msra.mxu0 %v533
    %709 = vmatpush.bf16.msra.mxu0 %v531
    %710 = vmatpush.bf16.msra.mxu0 %v529
    %711 = vmatpush.bf16.msra.mxu0 %v527
    %712 = vmatmul.bf16.gmra.mxu0 %v152
    %v713 = vpop.f32.mrf.mxu0
    %v714 = vadd.f32 %v701, %v713
    %v715 = vpop.f32.mrf.mxu0
    %716 = vdwg.mxu0
    %717 = vmatpush.bf16.msra.mxu0 %v462
    %718 = vmatpush.bf16.msra.mxu0 %v460
    %719 = vmatpush.bf16.msra.mxu0 %v458
    %720 = vmatpush.bf16.msra.mxu0 %v456
    %721 = vmatpush.bf16.msra.mxu0 %v454
    %722 = vmatpush.bf16.msra.mxu0 %v452
    %723 = vmatpush.bf16.msra.mxu0 %v450
    %724 = vmatpush.bf16.msra.mxu0 %v448
    %725 = vmatmul.bf16.gmra.mxu0 %v147
    %v726 = vpop.f32.mrf.mxu0
    %v727 = vadd.f32 0.0, %v726
    %v728 = vpop.f32.mrf.mxu0
    %729 = vdwg.mxu0
    %730 = vmatpush.bf16.msra.mxu0 %v478
    %731 = vmatpush.bf16.msra.mxu0 %v476
    %732 = vmatpush.bf16.msra.mxu0 %v474
    %733 = vmatpush.bf16.msra.mxu0 %v472
    %734 = vmatpush.bf16.msra.mxu0 %v470
    %735 = vmatpush.bf16.msra.mxu0 %v468
    %736 = vmatpush.bf16.msra.mxu0 %v466
    %737 = vmatpush.bf16.msra.mxu0 %v464
    %738 = vmatmul.bf16.gmra.mxu0 %v148
    %v739 = vpop.f32.mrf.mxu0
    %v740 = vadd.f32 %v727, %v739
    %v741 = vpop.f32.mrf.mxu0
    %742 = vdwg.mxu0
    %743 = vmatpush.bf16.msra.mxu0 %v494
    %744 = vmatpush.bf16.msra.mxu0 %v492
    %745 = vmatpush.bf16.msra.mxu0 %v490
    %746 = vmatpush.bf16.msra.mxu0 %v488
    %747 = vmatpush.bf16.msra.mxu0 %v486
    %748 = vmatpush.bf16.msra.mxu0 %v484
    %749 = vmatpush.bf16.msra.mxu0 %v482
    %750 = vmatpush.bf16.msra.mxu0 %v480
    %751 = vmatmul.bf16.gmra.mxu0 %v149
    %v752 = vpop.f32.mrf.mxu0
    %v753 = vadd.f32 %v740, %v752
    %v754 = vpop.f32.mrf.mxu0
    %755 = vdwg.mxu0
    %756 = vmatpush.bf16.msra.mxu0 %v510
    %757 = vmatpush.bf16.msra.mxu0 %v508
    %758 = vmatpush.bf16.msra.mxu0 %v506
    %759 = vmatpush.bf16.msra.mxu0 %v504
    %760 = vmatpush.bf16.msra.mxu0 %v502
    %761 = vmatpush.bf16.msra.mxu0 %v500
    %762 = vmatpush.bf16.msra.mxu0 %v498
    %763 = vmatpush.bf16.msra.mxu0 %v496
    %764 = vmatmul.bf16.gmra.mxu0 %v150
    %v765 = vpop.f32.mrf.mxu0
    %v766 = vadd.f32 %v753, %v765
    %v767 = vpop.f32.mrf.mxu0
    %768 = vdwg.mxu0
    %769 = vmatpush.bf16.msra.mxu0 %v526
    %770 = vmatpush.bf16.msra.mxu0 %v524
    %771 = vmatpush.bf16.msra.mxu0 %v522
    %772 = vmatpush.bf16.msra.mxu0 %v520
    %773 = vmatpush.bf16.msra.mxu0 %v518
    %774 = vmatpush.bf16.msra.mxu0 %v516
    %775 = vmatpush.bf16.msra.mxu0 %v514
    %776 = vmatpush.bf16.msra.mxu0 %v512
    %777 = vmatmul.bf16.gmra.mxu0 %v151
    %v778 = vpop.f32.mrf.mxu0
    %v779 = vadd.f32 %v766, %v778
    %v780 = vpop.f32.mrf.mxu0
    %781 = vdwg.mxu0
    %782 = vmatpush.bf16.msra.mxu0 %v542
    %783 = vmatpush.bf16.msra.mxu0 %v540
    %784 = vmatpush.bf16.msra.mxu0 %v538
    %785 = vmatpush.bf16.msra.mxu0 %v536
    %786 = vmatpush.bf16.msra.mxu0 %v534
    %787 = vmatpush.bf16.msra.mxu0 %v532
    %788 = vmatpush.bf16.msra.mxu0 %v530
    %789 = vmatpush.bf16.msra.mxu0 %v528
    %790 = vmatmul.bf16.gmra.mxu0 %v152
    %v791 = vpop.f32.mrf.mxu0
    %v792 = vadd.f32 %v779, %v791
    %v793 = vpop.f32.mrf.mxu0
    %794 = vdwg.mxu0
    %v795 = vadd.f32 %v37, %v714
    %v796 = vadd.f32 %v38, %v792
    %797 = vst [vmem:[#allocation5] sm:$0xff] %v795
    %798 = vst [vmem:[#allocation5 + $0x8] sm:$0xff] %v796
    // Predicated region
    $region22: #{quantized_linear_forward.1} parent=1 // pred_check
      %p799 = pneg %p31
    $region23: #{quantized_linear_forward.1} parent=1 // pred_check_branch
      %801 = sbr.rel (%p799) target = $region25
    $region24: #{quantized_linear_forward.1} parent=1 // pred_region
      %v802 = vld [vmem:[#allocation5] sm:$0xff]
      %v803 = vld [vmem:[#allocation5 + $0x8] sm:$0xff]
      %v804 = vld [vmem:[%s2] sm:$0x3]
      %v806 = vperm.slane %v804, 0
      %v807 = vperm.slane %v804, 1
      %v810 = vadd.f32 %v802, %v806
      %v811 = vadd.f32 %v803, %v807
      %v812 = vmul.f32 %v810, 0.05
      %v813 = vmul.f32 %v811, 0.05
      %814 = vst [vmem:[#allocation5] sm:$0xff] %v812
      %815 = vst [vmem:[#allocation5 + $0x8] sm:$0xff] %v813
    $region25: #{quantized_linear_forward.1} parent=1 // pred_fallthru
      _
    // Predicated region
    $region26: #{quantized_linear_forward.1} parent=1 // pred_check
      _
    $region27: #{quantized_linear_forward.1} parent=1 // pred_check_branch
      %817 = sbr.rel (0) target = $region29
    $region28: #{quantized_linear_forward.1} parent=1 // pred_region
      %819 = vsyncadd [#allocation4], 0
      %s821 = sshll.u32 [#allocation5], 4
      %s822 = int_to_ptr.vmem [resolvable:$true] %s821
      %s823 = sshll.u32 %s3, 4
      %s824 = int_to_ptr.hbm [resolvable:$true] %s823
      %826 = dma.vmem_to_hbm [thread:$0]  %s822, 256, %s824, [#allocation4]
    $region29: #{quantized_linear_forward.1} parent=1 // pred_fallthru
      _
    // Predicated region
    $region30: #{quantized_linear_forward.1} parent=1 // pred_check
      _
    $region31: #{quantized_linear_forward.1} parent=1 // pred_check_branch
      %828 = sbr.rel (0) target = $region33
    $region32: #{quantized_linear_forward.1} parent=1 // pred_region
      %830 = dma.done [#allocation4], 256
    $region33: #{quantized_linear_forward.1} parent=1 // pred_fallthru
      _
    %831 = vsyncpa [#allocation3], 1
    %832 = vsyncpa [#allocation4], 1

</llo_original>
